<compile_context>
chip_gen: v7x
topology: tpu7x:2x2x1
jax: 0.10.0
libtpu: 0.0.40
codegen_flags: <defaults>
</compile_context>

<pallas_src>
import functools

import jax
import jax.numpy as jnp
import numpy as np
from jax import lax
from jax.experimental import pallas as pl
from jax.experimental.pallas import tpu as pltpu


# ----------------------------- kernel helpers (traced inside the kernel) ------------

def _matmul_t(x, w):
    # x: (R, Din), w: (Dout, Din) -> (R, Dout); matches torch nn.Linear (y = x @ W.T)
    return lax.dot_general(x, w, (((1,), (1,)), ((), ())),
                           preferred_element_type=jnp.float32)


def _layer_norm(x, g, b, eps=1e-5):
    mu = jnp.mean(x, axis=-1, keepdims=True)
    var = jnp.mean((x - mu) ** 2, axis=-1, keepdims=True)
    return (x - mu) * lax.rsqrt(var + eps) * g + b


# ----------------------------------- Pallas kernel ----------------------------------

def exercise_block_kernel(n_heads, seq_len, x_ref, w_ref, out_ref):
    """x_ref: (R, D) flattened batch*seq rows.  w_ref: packed parameter slab (6D+16, D)."""
    x = x_ref[...]                                  # (R, D)
    R, D = x.shape
    hd = D // n_heads
    scale = 1.0 / float(np.sqrt(hd))
    D3 = 3 * D
    vbase = 6 * D

    # --- unpack parameter slab (static, 8-aligned row slices of a single VMEM buffer) ---
    wqkv = w_ref[0:D3, :]                           # (3D, D): [Wq; Wk; Wv]
    wo   = w_ref[D3:4 * D, :]                       # (D, D)
    w1   = w_ref[4 * D:5 * D, :]                    # (D, D)
    w2   = w_ref[5 * D:6 * D, :]                    # (D, D)
    vecs = w_ref[vbase:vbase + 16, :]               # (16, D) aligned vector block
    bq, bk, bv, bo = vecs[0:1], vecs[1:2], vecs[2:3], vecs[3:4]
    ln_g, ln_b     = vecs[4:5], vecs[5:6]
    ln1_g, ln1_b   = vecs[6:7], vecs[7:8]
    b1, b2         = vecs[8:9], vecs[9:10]

    # --- outer LayerNorm branch of ExerciseBlock_layer -------------------------------
    out_norm = _layer_norm(x, ln_g, ln_b)

    # --- additive causal mask, block-diagonal over batch elements (built ONCE) -------
    row = lax.broadcasted_iota(jnp.int32, (R, R), 0)
    col = lax.broadcasted_iota(jnp.int32, (R, R), 1)
    if (seq_len & (seq_len - 1)) == 0:              # power-of-2 seq_len: shift-free block test
        same_block = (row & (-seq_len)) == (col & (-seq_len))
    else:
        same_block = (row // seq_len) == (col // seq_len)
    allowed = same_block & (col <= row)
    neg_mask = jnp.where(allowed, 0.0, -1e30).astype(jnp.float32)

    # --- fused QKV projection: one (R,D)x(D,3D) MXU push ------------------------------
    qkv = _matmul_t(x, wqkv)                        # (R, 3D)
    q = qkv[:, 0:D] + bq
    k = qkv[:, D:2 * D] + bk
    v = qkv[:, 2 * D:3 * D] + bv

    # --- multi-head causal attention (static loop over heads, lane slices) ------------
    heads = []
    for h in range(n_heads):
        lo, hi = h * hd, (h + 1) * hd
        q_h = q[:, lo:hi]                           # (R, hd)
        k_h = k[:, lo:hi]
        v_h = v[:, lo:hi]

        s = _matmul_t(q_h, k_h) * scale + neg_mask  # (R, R), masked entries ~-1e30
        s = s - jnp.max(s, axis=-1, keepdims=True)  # row max always finite (diag allowed)
        p = jnp.exp(s)                              # masked entries underflow to exactly 0
        p = p * pl.reciprocal(jnp.sum(p, axis=-1, keepdims=True), approx=True)
        heads.append(jnp.dot(p, v_h, preferred_element_type=jnp.float32))   # (R, hd)

    o = jnp.concatenate(heads, axis=-1)             # (R, D) lane-packed head outputs

    # single full-width output projection + bias + residual (out_atten += q_input)
    attn = _matmul_t(o, wo) + bo + x

    # --- LayerNorm1 + FFN + residual (MultiHeadWithFFN) ------------------------------
    norm1 = _layer_norm(attn, ln1_g, ln1_b)
    h1 = jnp.maximum(_matmul_t(norm1, w1) + b1, 0.0)
    ffn = _matmul_t(h1, w2) + b2

    # --- final add of ExerciseBlock_layer (ffn + norm1 + out_norm) --------------------
    out_ref[...] = (ffn + norm1 + out_norm).astype(out_ref.dtype)


# ----------------------------------- wrapper -----------------------------------------

def pack_params(params, D):
    """Pack all weights/biases/LN params into one (6D+16, D) f32 slab (single DMA)."""
    n_rows = 6 * D + 16
    slab = np.zeros((n_rows, D), np.float32)
    slab[0:D, :]         = np.asarray(params["wq"], np.float32)
    slab[D:2 * D, :]     = np.asarray(params["wk"], np.float32)
    slab[2 * D:3 * D, :] = np.asarray(params["wv"], np.float32)
    slab[3 * D:4 * D, :] = np.asarray(params["wo"], np.float32)
    slab[4 * D:5 * D, :] = np.asarray(params["w1"], np.float32)
    slab[5 * D:6 * D, :] = np.asarray(params["w2"], np.float32)
    v = 6 * D
    vec_names = ["bq", "bk", "bv", "bo", "ln_g", "ln_b", "ln1_g", "ln1_b", "b1", "b2"]
    for i, name in enumerate(vec_names):
        slab[v + i, :] = np.asarray(params[name], np.float32).reshape(D)
    return jnp.asarray(slab)


def exercise_block(x, params, n_heads):
    B, S, D = x.shape
    assert D % n_heads == 0 and D % 8 == 0
    R = B * S                                        # single grid step: all rows at once

    x2 = x.reshape(R, D)                             # flatten batch into rows (wrapper side)
    slab = pack_params(params, D)                    # one packed weight slab -> one DMA

    # advisory cost estimate for XLA scheduling around this tiny custom call
    flops = 2 * R * D * (3 * D) + 4 * R * R * D + 6 * R * D * D
    transcendentals = n_heads * R * R + 3 * R
    bytes_accessed = int(4 * (2 * R * D + slab.size))

    out2 = pl.pallas_call(
        functools.partial(exercise_block_kernel, n_heads, S),
        out_shape=jax.ShapeDtypeStruct((R, D), jnp.float32),
        grid=(1,),                                   # single step on ALL generations (incl. v7x)
        in_specs=[pl.BlockSpec((R, D), lambda i: (0, 0)),
                  pl.BlockSpec(slab.shape, lambda i: (0, 0))],
        out_specs=pl.BlockSpec((R, D), lambda i: (0, 0)),
        compiler_params=pltpu.CompilerParams(
            dimension_semantics=("arbitrary",)),
        cost_estimate=pl.CostEstimate(flops=int(flops),
                                      transcendentals=int(transcendentals),
                                      bytes_accessed=bytes_accessed),
    )(x2, slab)
    return out2.reshape(B, S, D)


# ----------------------------------- reference (plain JAX) ---------------------------

def reference(x, p, n_heads):
    def ln(t, g, b):
        mu = t.mean(-1, keepdims=True)
        var = ((t - mu) ** 2).mean(-1, keepdims=True)
        return (t - mu) / jnp.sqrt(var + 1e-5) * g + b

    B, S, D = x.shape
    hd = D // n_heads
    out_norm = ln(x, p["ln_g"], p["ln_b"])
    q = x @ p["wq"].T + p["bq"]
    k = x @ p["wk"].T + p["bk"]
    v = x @ p["wv"].T + p["bv"]
    qh = q.reshape(B, S, n_heads, hd).transpose(0, 2, 1, 3)
    kh = k.reshape(B, S, n_heads, hd).transpose(0, 2, 1, 3)
    vh = v.reshape(B, S, n_heads, hd).transpose(0, 2, 1, 3)
    scores = jnp.einsum("bhqd,bhkd->bhqk", qh, kh) / jnp.sqrt(hd)
    mask = jnp.tril(jnp.ones((S, S), bool))
    scores = jnp.where(mask, scores, -1e30)
    pa = jax.nn.softmax(scores, axis=-1)
    attn = jnp.einsum("bhqk,bhkd->bhqd", pa, vh).transpose(0, 2, 1, 3).reshape(B, S, D)
    attn = attn @ p["wo"].T + p["bo"]
    attn = attn + x
    norm1 = ln(attn, p["ln1_g"], p["ln1_b"])
    h1 = jax.nn.relu(norm1 @ p["w1"].T + p["b1"])
    ffn = h1 @ p["w2"].T + p["b2"]
    return ffn + norm1 + out_norm


# ----------------------------------- main --------------------------------------------

if __name__ == "__main__":
    B, S, D, H = 2, 8, 32, 4       # batch, seq, n_dims, n_heads

    key = jax.random.PRNGKey(0)
    keys = jax.random.split(key, 16)

    def w(k, shape, scale=0.1):
        return (scale * jax.random.normal(k, shape)).astype(jnp.float32)

    params = {
        # nn.MultiheadAttention in_proj (split into q/k/v) and out_proj
        "wq": w(keys[0], (D, D)), "wk": w(keys[1], (D, D)), "wv": w(keys[2], (D, D)),
        "wo": w(keys[3], (D, D)),
        "bq": w(keys[4], (1, D)), "bk": w(keys[5], (1, D)), "bv": w(keys[6], (1, D)),
        "bo": w(keys[7], (1, D)),
        # outer LayerNorm (ExerciseBlock_layer.layer_norm) — PyTorch init: gamma=1, beta=0
        "ln_g": jnp.ones((1, D), jnp.float32), "ln_b": jnp.zeros((1, D), jnp.float32),
        # MultiHeadWithFFN.layer_norm1
        "ln1_g": jnp.ones((1, D), jnp.float32), "ln1_b": jnp.zeros((1, D), jnp.float32),
        # FFN
        "w1": w(keys[8], (D, D)), "b1": w(keys[9], (1, D)),
        "w2": w(keys[10], (D, D)), "b2": w(keys[11], (1, D)),
    }
    # NOTE: MultiHeadWithFFN also declares layer_norm2 but never uses it in forward.

    x = jax.random.normal(keys[12], (B, S, D), dtype=jnp.float32)

    out = exercise_block(x, params, H)
    out = jax.block_until_ready(out)

    ref = jax.block_until_ready(reference(x, params, H))
    np.testing.assert_allclose(np.asarray(out), np.asarray(ref), rtol=5e-3, atol=5e-3)

    print("KERNEL_OK")
</pallas_src>

<mosaic_0001>
module attributes {stable_mosaic.version = 11 : i64} {
  func.func @exercise_block_kernel(%arg0: i32, %arg1: memref<16x32xf32, #tpu.memory_space<vmem>>, %arg2: memref<208x32xf32, #tpu.memory_space<vmem>>, %arg3: memref<16x32xf32, #tpu.memory_space<vmem>>) attributes {dimension_semantics = [#tpu.dimension_semantics<arbitrary>], iteration_bounds = array<i64: 1>, scalar_prefetch = 0 : i64, scratch_operands = 0 : i64, tpu.core_type = #tpu.core_type<tc>, window_params = [{pipeline_mode = #tpu.pipeline_mode<synchronous>, transform_indices = @transform_0, window_bounds = array<i64: 16, 32>}, {pipeline_mode = #tpu.pipeline_mode<synchronous>, transform_indices = @transform_1, window_bounds = array<i64: 208, 32>}, {pipeline_mode = #tpu.pipeline_mode<synchronous>, transform_indices = @transform_2, window_bounds = array<i64: 16, 32>}]} {
    %c0 = arith.constant 0 : index
    %c0_0 = arith.constant 0 : index
    %0 = vector.load %arg1[%c0, %c0_0] : memref<16x32xf32, #tpu.memory_space<vmem>>, vector<16x32xf32>
    %c0_1 = arith.constant 0 : index
    %c0_2 = arith.constant 0 : index
    %1 = vector.load %arg2[%c0_1, %c0_2] : memref<208x32xf32, #tpu.memory_space<vmem>>, vector<96x32xf32>
    %c96 = arith.constant 96 : index
    %c0_3 = arith.constant 0 : index
    %2 = vector.load %arg2[%c96, %c0_3] : memref<208x32xf32, #tpu.memory_space<vmem>>, vector<32x32xf32>
    %c128 = arith.constant 128 : index
    %c0_4 = arith.constant 0 : index
    %3 = vector.load %arg2[%c128, %c0_4] : memref<208x32xf32, #tpu.memory_space<vmem>>, vector<32x32xf32>
    %c160 = arith.constant 160 : index
    %c0_5 = arith.constant 0 : index
    %4 = vector.load %arg2[%c160, %c0_5] : memref<208x32xf32, #tpu.memory_space<vmem>>, vector<32x32xf32>
    %c192 = arith.constant 192 : index
    %c0_6 = arith.constant 0 : index
    %5 = vector.load %arg2[%c192, %c0_6] : memref<208x32xf32, #tpu.memory_space<vmem>>, vector<16x32xf32>
    %6 = vector.extract_strided_slice %5 {offsets = [0, 0], sizes = [1, 32], strides = [1, 1]} : vector<16x32xf32> to vector<1x32xf32>
    %7 = vector.extract_strided_slice %5 {offsets = [1, 0], sizes = [1, 32], strides = [1, 1]} : vector<16x32xf32> to vector<1x32xf32>
    %8 = vector.extract_strided_slice %5 {offsets = [2, 0], sizes = [1, 32], strides = [1, 1]} : vector<16x32xf32> to vector<1x32xf32>
    %9 = vector.extract_strided_slice %5 {offsets = [3, 0], sizes = [1, 32], strides = [1, 1]} : vector<16x32xf32> to vector<1x32xf32>
    %10 = vector.extract_strided_slice %5 {offsets = [4, 0], sizes = [1, 32], strides = [1, 1]} : vector<16x32xf32> to vector<1x32xf32>
    %11 = vector.extract_strided_slice %5 {offsets = [5, 0], sizes = [1, 32], strides = [1, 1]} : vector<16x32xf32> to vector<1x32xf32>
    %12 = vector.extract_strided_slice %5 {offsets = [6, 0], sizes = [1, 32], strides = [1, 1]} : vector<16x32xf32> to vector<1x32xf32>
    %13 = vector.extract_strided_slice %5 {offsets = [7, 0], sizes = [1, 32], strides = [1, 1]} : vector<16x32xf32> to vector<1x32xf32>
    %14 = vector.extract_strided_slice %5 {offsets = [8, 0], sizes = [1, 32], strides = [1, 1]} : vector<16x32xf32> to vector<1x32xf32>
    %15 = vector.extract_strided_slice %5 {offsets = [9, 0], sizes = [1, 32], strides = [1, 1]} : vector<16x32xf32> to vector<1x32xf32>
    %cst = arith.constant dense<0.000000e+00> : vector<16xf32>
    %16 = vector.multi_reduction <add>, %0, %cst [1] : vector<16x32xf32> to vector<16xf32>
    %17 = vector.shape_cast %16 : vector<16xf32> to vector<16x1xf32>
    %cst_7 = arith.constant 3.200000e+01 : f32
    %18 = vector.broadcast %cst_7 : f32 to vector<16x1xf32>
    %19 = arith.divf %17, %18 : vector<16x1xf32>
    %20 = vector.broadcast %19 : vector<16x1xf32> to vector<16x32xf32>
    %21 = arith.subf %0, %20 : vector<16x32xf32>
    %22 = arith.mulf %21, %21 : vector<16x32xf32>
    %cst_8 = arith.constant dense<0.000000e+00> : vector<16xf32>
    %23 = vector.multi_reduction <add>, %22, %cst_8 [1] : vector<16x32xf32> to vector<16xf32>
    %24 = vector.shape_cast %23 : vector<16xf32> to vector<16x1xf32>
    %cst_9 = arith.constant 3.200000e+01 : f32
    %25 = vector.broadcast %cst_9 : f32 to vector<16x1xf32>
    %26 = arith.divf %24, %25 : vector<16x1xf32>
    %27 = vector.broadcast %19 : vector<16x1xf32> to vector<16x32xf32>
    %28 = arith.subf %0, %27 : vector<16x32xf32>
    %cst_10 = arith.constant 9.99999974E-6 : f32
    %29 = vector.broadcast %cst_10 : f32 to vector<16x1xf32>
    %30 = arith.addf %26, %29 : vector<16x1xf32>
    %31 = math.rsqrt %30 : vector<16x1xf32>
    %32 = vector.broadcast %31 : vector<16x1xf32> to vector<16x32xf32>
    %33 = arith.mulf %28, %32 : vector<16x32xf32>
    %34 = vector.broadcast %10 : vector<1x32xf32> to vector<16x32xf32>
    %35 = arith.mulf %33, %34 : vector<16x32xf32>
    %36 = vector.broadcast %11 : vector<1x32xf32> to vector<16x32xf32>
    %37 = arith.addf %35, %36 : vector<16x32xf32>
    %38 = tpu.iota {dimensions = array<i32: 0>} : vector<16x16xi32>
    %39 = tpu.iota {dimensions = array<i32: 1>} : vector<16x16xi32>
    %c-8_i32 = arith.constant -8 : i32
    %40 = vector.broadcast %c-8_i32 : i32 to vector<16x16xi32>
    %41 = arith.andi %38, %40 : vector<16x16xi32>
    %c-8_i32_11 = arith.constant -8 : i32
    %42 = vector.broadcast %c-8_i32_11 : i32 to vector<16x16xi32>
    %43 = arith.andi %39, %42 : vector<16x16xi32>
    %44 = arith.cmpi eq, %41, %43 : vector<16x16xi32>
    %45 = arith.cmpi sle, %39, %38 : vector<16x16xi32>
    %46 = arith.andi %44, %45 : vector<16x16xi1>
    %cst_12 = arith.constant 0.000000e+00 : f32
    %cst_13 = arith.constant -1.000000e+30 : f32
    %47 = vector.broadcast %cst_12 : f32 to vector<16x16xf32>
    %48 = vector.broadcast %cst_13 : f32 to vector<16x16xf32>
    %49 = arith.select %46, %47, %48 : vector<16x16xi1>, vector<16x16xf32>
    %cst_14 = arith.constant dense<0.000000e+00> : vector<16x96xf32>
    %50 = tpu.matmul %0, %1, %cst_14 {dimension_numbers = #tpu.dot_dimension_numbers<[1], [1], [0], [0], [0, 0, 1, 0], [], []>} : vector<16x32xf32>, vector<96x32xf32>, vector<16x96xf32> -> vector<16x96xf32>
    %51 = vector.extract_strided_slice %50 {offsets = [0, 0], sizes = [16, 32], strides = [1, 1]} : vector<16x96xf32> to vector<16x32xf32>
    %52 = vector.broadcast %6 : vector<1x32xf32> to vector<16x32xf32>
    %53 = arith.addf %51, %52 : vector<16x32xf32>
    %54 = vector.extract_strided_slice %50 {offsets = [0, 32], sizes = [16, 32], strides = [1, 1]} : vector<16x96xf32> to vector<16x32xf32>
    %55 = vector.broadcast %7 : vector<1x32xf32> to vector<16x32xf32>
    %56 = arith.addf %54, %55 : vector<16x32xf32>
    %57 = vector.extract_strided_slice %50 {offsets = [0, 64], sizes = [16, 32], strides = [1, 1]} : vector<16x96xf32> to vector<16x32xf32>
    %58 = vector.broadcast %8 : vector<1x32xf32> to vector<16x32xf32>
    %59 = arith.addf %57, %58 : vector<16x32xf32>
    %60 = vector.extract_strided_slice %53 {offsets = [0, 0], sizes = [16, 8], strides = [1, 1]} : vector<16x32xf32> to vector<16x8xf32>
    %61 = vector.extract_strided_slice %56 {offsets = [0, 0], sizes = [16, 8], strides = [1, 1]} : vector<16x32xf32> to vector<16x8xf32>
    %62 = vector.extract_strided_slice %59 {offsets = [0, 0], sizes = [16, 8], strides = [1, 1]} : vector<16x32xf32> to vector<16x8xf32>
    %cst_15 = arith.constant dense<0.000000e+00> : vector<16x16xf32>
    %63 = tpu.matmul %60, %61, %cst_15 {dimension_numbers = #tpu.dot_dimension_numbers<[1], [1], [0], [0], [0, 0, 1, 0], [], []>} : vector<16x8xf32>, vector<16x8xf32>, vector<16x16xf32> -> vector<16x16xf32>
    %cst_16 = arith.constant 0.353553385 : f32
    %64 = vector.broadcast %cst_16 : f32 to vector<16x16xf32>
    %65 = arith.mulf %63, %64 : vector<16x16xf32>
    %66 = arith.addf %65, %49 : vector<16x16xf32>
    %cst_17 = arith.constant dense<0xFF800000> : vector<16xf32>
    %67 = vector.multi_reduction <maximumf>, %66, %cst_17 [1] : vector<16x16xf32> to vector<16xf32>
    %68 = vector.shape_cast %67 : vector<16xf32> to vector<16x1xf32>
    %69 = vector.broadcast %68 : vector<16x1xf32> to vector<16x16xf32>
    %70 = arith.subf %66, %69 : vector<16x16xf32>
    %71 = math.exp %70 : vector<16x16xf32>
    %cst_18 = arith.constant dense<0.000000e+00> : vector<16xf32>
    %72 = vector.multi_reduction <add>, %71, %cst_18 [1] : vector<16x16xf32> to vector<16xf32>
    %73 = vector.shape_cast %72 : vector<16xf32> to vector<16x1xf32>
    %74 = tpu.reciprocal %73 {approx = true} : vector<16x1xf32> -> vector<16x1xf32>
    %75 = vector.broadcast %74 : vector<16x1xf32> to vector<16x16xf32>
    %76 = arith.mulf %71, %75 : vector<16x16xf32>
    %cst_19 = arith.constant dense<0.000000e+00> : vector<16x8xf32>
    %77 = tpu.matmul %76, %62, %cst_19 {dimension_numbers = #tpu.dot_dimension_numbers<[1], [0], [0], [1], [0, 0, 1, 1], [], []>} : vector<16x16xf32>, vector<16x8xf32>, vector<16x8xf32> -> vector<16x8xf32>
    %78 = vector.extract_strided_slice %53 {offsets = [0, 8], sizes = [16, 8], strides = [1, 1]} : vector<16x32xf32> to vector<16x8xf32>
    %79 = vector.extract_strided_slice %56 {offsets = [0, 8], sizes = [16, 8], strides = [1, 1]} : vector<16x32xf32> to vector<16x8xf32>
    %80 = vector.extract_strided_slice %59 {offsets = [0, 8], sizes = [16, 8], strides = [1, 1]} : vector<16x32xf32> to vector<16x8xf32>
    %cst_20 = arith.constant dense<0.000000e+00> : vector<16x16xf32>
    %81 = tpu.matmul %78, %79, %cst_20 {dimension_numbers = #tpu.dot_dimension_numbers<[1], [1], [0], [0], [0, 0, 1, 0], [], []>} : vector<16x8xf32>, vector<16x8xf32>, vector<16x16xf32> -> vector<16x16xf32>
    %cst_21 = arith.constant 0.353553385 : f32
    %82 = vector.broadcast %cst_21 : f32 to vector<16x16xf32>
    %83 = arith.mulf %81, %82 : vector<16x16xf32>
    %84 = arith.addf %83, %49 : vector<16x16xf32>
    %cst_22 = arith.constant dense<0xFF800000> : vector<16xf32>
    %85 = vector.multi_reduction <maximumf>, %84, %cst_22 [1] : vector<16x16xf32> to vector<16xf32>
    %86 = vector.shape_cast %85 : vector<16xf32> to vector<16x1xf32>
    %87 = vector.broadcast %86 : vector<16x1xf32> to vector<16x16xf32>
    %88 = arith.subf %84, %87 : vector<16x16xf32>
    %89 = math.exp %88 : vector<16x16xf32>
    %cst_23 = arith.constant dense<0.000000e+00> : vector<16xf32>
    %90 = vector.multi_reduction <add>, %89, %cst_23 [1] : vector<16x16xf32> to vector<16xf32>
    %91 = vector.shape_cast %90 : vector<16xf32> to vector<16x1xf32>
    %92 = tpu.reciprocal %91 {approx = true} : vector<16x1xf32> -> vector<16x1xf32>
    %93 = vector.broadcast %92 : vector<16x1xf32> to vector<16x16xf32>
    %94 = arith.mulf %89, %93 : vector<16x16xf32>
    %cst_24 = arith.constant dense<0.000000e+00> : vector<16x8xf32>
    %95 = tpu.matmul %94, %80, %cst_24 {dimension_numbers = #tpu.dot_dimension_numbers<[1], [0], [0], [1], [0, 0, 1, 1], [], []>} : vector<16x16xf32>, vector<16x8xf32>, vector<16x8xf32> -> vector<16x8xf32>
    %96 = vector.extract_strided_slice %53 {offsets = [0, 16], sizes = [16, 8], strides = [1, 1]} : vector<16x32xf32> to vector<16x8xf32>
    %97 = vector.extract_strided_slice %56 {offsets = [0, 16], sizes = [16, 8], strides = [1, 1]} : vector<16x32xf32> to vector<16x8xf32>
    %98 = vector.extract_strided_slice %59 {offsets = [0, 16], sizes = [16, 8], strides = [1, 1]} : vector<16x32xf32> to vector<16x8xf32>
    %cst_25 = arith.constant dense<0.000000e+00> : vector<16x16xf32>
    %99 = tpu.matmul %96, %97, %cst_25 {dimension_numbers = #tpu.dot_dimension_numbers<[1], [1], [0], [0], [0, 0, 1, 0], [], []>} : vector<16x8xf32>, vector<16x8xf32>, vector<16x16xf32> -> vector<16x16xf32>
    %cst_26 = arith.constant 0.353553385 : f32
    %100 = vector.broadcast %cst_26 : f32 to vector<16x16xf32>
    %101 = arith.mulf %99, %100 : vector<16x16xf32>
    %102 = arith.addf %101, %49 : vector<16x16xf32>
    %cst_27 = arith.constant dense<0xFF800000> : vector<16xf32>
    %103 = vector.multi_reduction <maximumf>, %102, %cst_27 [1] : vector<16x16xf32> to vector<16xf32>
    %104 = vector.shape_cast %103 : vector<16xf32> to vector<16x1xf32>
    %105 = vector.broadcast %104 : vector<16x1xf32> to vector<16x16xf32>
    %106 = arith.subf %102, %105 : vector<16x16xf32>
    %107 = math.exp %106 : vector<16x16xf32>
    %cst_28 = arith.constant dense<0.000000e+00> : vector<16xf32>
    %108 = vector.multi_reduction <add>, %107, %cst_28 [1] : vector<16x16xf32> to vector<16xf32>
    %109 = vector.shape_cast %108 : vector<16xf32> to vector<16x1xf32>
    %110 = tpu.reciprocal %109 {approx = true} : vector<16x1xf32> -> vector<16x1xf32>
    %111 = vector.broadcast %110 : vector<16x1xf32> to vector<16x16xf32>
    %112 = arith.mulf %107, %111 : vector<16x16xf32>
    %cst_29 = arith.constant dense<0.000000e+00> : vector<16x8xf32>
    %113 = tpu.matmul %112, %98, %cst_29 {dimension_numbers = #tpu.dot_dimension_numbers<[1], [0], [0], [1], [0, 0, 1, 1], [], []>} : vector<16x16xf32>, vector<16x8xf32>, vector<16x8xf32> -> vector<16x8xf32>
    %114 = vector.extract_strided_slice %53 {offsets = [0, 24], sizes = [16, 8], strides = [1, 1]} : vector<16x32xf32> to vector<16x8xf32>
    %115 = vector.extract_strided_slice %56 {offsets = [0, 24], sizes = [16, 8], strides = [1, 1]} : vector<16x32xf32> to vector<16x8xf32>
    %116 = vector.extract_strided_slice %59 {offsets = [0, 24], sizes = [16, 8], strides = [1, 1]} : vector<16x32xf32> to vector<16x8xf32>
    %cst_30 = arith.constant dense<0.000000e+00> : vector<16x16xf32>
    %117 = tpu.matmul %114, %115, %cst_30 {dimension_numbers = #tpu.dot_dimension_numbers<[1], [1], [0], [0], [0, 0, 1, 0], [], []>} : vector<16x8xf32>, vector<16x8xf32>, vector<16x16xf32> -> vector<16x16xf32>
    %cst_31 = arith.constant 0.353553385 : f32
    %118 = vector.broadcast %cst_31 : f32 to vector<16x16xf32>
    %119 = arith.mulf %117, %118 : vector<16x16xf32>
    %120 = arith.addf %119, %49 : vector<16x16xf32>
    %cst_32 = arith.constant dense<0xFF800000> : vector<16xf32>
    %121 = vector.multi_reduction <maximumf>, %120, %cst_32 [1] : vector<16x16xf32> to vector<16xf32>
    %122 = vector.shape_cast %121 : vector<16xf32> to vector<16x1xf32>
    %123 = vector.broadcast %122 : vector<16x1xf32> to vector<16x16xf32>
    %124 = arith.subf %120, %123 : vector<16x16xf32>
    %125 = math.exp %124 : vector<16x16xf32>
    %cst_33 = arith.constant dense<0.000000e+00> : vector<16xf32>
    %126 = vector.multi_reduction <add>, %125, %cst_33 [1] : vector<16x16xf32> to vector<16xf32>
    %127 = vector.shape_cast %126 : vector<16xf32> to vector<16x1xf32>
    %128 = tpu.reciprocal %127 {approx = true} : vector<16x1xf32> -> vector<16x1xf32>
    %129 = vector.broadcast %128 : vector<16x1xf32> to vector<16x16xf32>
    %130 = arith.mulf %125, %129 : vector<16x16xf32>
    %cst_34 = arith.constant dense<0.000000e+00> : vector<16x8xf32>
    %131 = tpu.matmul %130, %116, %cst_34 {dimension_numbers = #tpu.dot_dimension_numbers<[1], [0], [0], [1], [0, 0, 1, 1], [], []>} : vector<16x16xf32>, vector<16x8xf32>, vector<16x8xf32> -> vector<16x8xf32>
    %132 = tpu.concatenate %77, %95, %113, %131 in 1 : vector<16x8xf32>, vector<16x8xf32>, vector<16x8xf32>, vector<16x8xf32> -> vector<16x32xf32>
    %cst_35 = arith.constant dense<0.000000e+00> : vector<16x32xf32>
    %133 = tpu.matmul %132, %2, %cst_35 {dimension_numbers = #tpu.dot_dimension_numbers<[1], [1], [0], [0], [0, 0, 1, 0], [], []>} : vector<16x32xf32>, vector<32x32xf32>, vector<16x32xf32> -> vector<16x32xf32>
    %134 = vector.broadcast %9 : vector<1x32xf32> to vector<16x32xf32>
    %135 = arith.addf %133, %134 : vector<16x32xf32>
    %136 = arith.addf %135, %0 : vector<16x32xf32>
    %cst_36 = arith.constant dense<0.000000e+00> : vector<16xf32>
    %137 = vector.multi_reduction <add>, %136, %cst_36 [1] : vector<16x32xf32> to vector<16xf32>
    %138 = vector.shape_cast %137 : vector<16xf32> to vector<16x1xf32>
    %cst_37 = arith.constant 3.200000e+01 : f32
    %139 = vector.broadcast %cst_37 : f32 to vector<16x1xf32>
    %140 = arith.divf %138, %139 : vector<16x1xf32>
    %141 = vector.broadcast %140 : vector<16x1xf32> to vector<16x32xf32>
    %142 = arith.subf %136, %141 : vector<16x32xf32>
    %143 = arith.mulf %142, %142 : vector<16x32xf32>
    %cst_38 = arith.constant dense<0.000000e+00> : vector<16xf32>
    %144 = vector.multi_reduction <add>, %143, %cst_38 [1] : vector<16x32xf32> to vector<16xf32>
    %145 = vector.shape_cast %144 : vector<16xf32> to vector<16x1xf32>
    %cst_39 = arith.constant 3.200000e+01 : f32
    %146 = vector.broadcast %cst_39 : f32 to vector<16x1xf32>
    %147 = arith.divf %145, %146 : vector<16x1xf32>
    %148 = vector.broadcast %140 : vector<16x1xf32> to vector<16x32xf32>
    %149 = arith.subf %136, %148 : vector<16x32xf32>
    %cst_40 = arith.constant 9.99999974E-6 : f32
    %150 = vector.broadcast %cst_40 : f32 to vector<16x1xf32>
    %151 = arith.addf %147, %150 : vector<16x1xf32>
    %152 = math.rsqrt %151 : vector<16x1xf32>
    %153 = vector.broadcast %152 : vector<16x1xf32> to vector<16x32xf32>
    %154 = arith.mulf %149, %153 : vector<16x32xf32>
    %155 = vector.broadcast %12 : vector<1x32xf32> to vector<16x32xf32>
    %156 = arith.mulf %154, %155 : vector<16x32xf32>
    %157 = vector.broadcast %13 : vector<1x32xf32> to vector<16x32xf32>
    %158 = arith.addf %156, %157 : vector<16x32xf32>
    %cst_41 = arith.constant dense<0.000000e+00> : vector<16x32xf32>
    %159 = tpu.matmul %158, %3, %cst_41 {dimension_numbers = #tpu.dot_dimension_numbers<[1], [1], [0], [0], [0, 0, 1, 0], [], []>} : vector<16x32xf32>, vector<32x32xf32>, vector<16x32xf32> -> vector<16x32xf32>
    %160 = vector.broadcast %14 : vector<1x32xf32> to vector<16x32xf32>
    %161 = arith.addf %159, %160 : vector<16x32xf32>
    %cst_42 = arith.constant 0.000000e+00 : f32
    %162 = vector.broadcast %cst_42 : f32 to vector<16x32xf32>
    %163 = arith.maximumf %161, %162 : vector<16x32xf32>
    %cst_43 = arith.constant dense<0.000000e+00> : vector<16x32xf32>
    %164 = tpu.matmul %163, %4, %cst_43 {dimension_numbers = #tpu.dot_dimension_numbers<[1], [1], [0], [0], [0, 0, 1, 0], [], []>} : vector<16x32xf32>, vector<32x32xf32>, vector<16x32xf32> -> vector<16x32xf32>
    %165 = vector.broadcast %15 : vector<1x32xf32> to vector<16x32xf32>
    %166 = arith.addf %164, %165 : vector<16x32xf32>
    %167 = arith.addf %166, %158 : vector<16x32xf32>
    %168 = arith.addf %167, %37 : vector<16x32xf32>
    %c0_44 = arith.constant 0 : index
    %c0_45 = arith.constant 0 : index
    %169 = vector.load %arg3[%c0_44, %c0_45] : memref<16x32xf32, #tpu.memory_space<vmem>>, vector<16x32xf32>
    tpu.vector_store %arg3[%c0_44, %c0_45], %168 {strides = array<i32>} : memref<16x32xf32, #tpu.memory_space<vmem>>, vector<16x32xf32>,
    return
  }
  func.func @transform_0(%arg0: i32) -> (i32, i32) {
    %c0_i32 = arith.constant 0 : i32
    %c0_i32_0 = arith.constant 0 : i32
    %c0_i32_1 = arith.constant 0 : i32
    return %c0_i32, %c0_i32_0 : i32, i32
  }
  func.func @transform_1(%arg0: i32) -> (i32, i32) {
    %c0_i32 = arith.constant 0 : i32
    %c0_i32_0 = arith.constant 0 : i32
    %c0_i32_1 = arith.constant 0 : i32
    return %c0_i32, %c0_i32_0 : i32, i32
  }
  func.func @transform_2(%arg0: i32) -> (i32, i32) {
    %c0_i32 = arith.constant 0 : i32
    %c0_i32_0 = arith.constant 0 : i32
    %c0_i32_1 = arith.constant 0 : i32
    return %c0_i32, %c0_i32_0 : i32, i32
  }
}

</mosaic_0001>

<llo_original>
// kernel: tpu_custom_call.1
$region0: #{tpu_custom_call.1}
  #allocation0 [shape = 'u32[]', space=smem, size = 0x4, offset = 0x4, fixed_abs, tag = 'smem constant byte address 0x4 - core index']
  #allocation1 [shape = 'u32[144,128]{1,0:T(1,128)}', space=vmem, size = 0x12000, scoped, tag = 'internal scratch']
  %s0 = inlined_call_operand.vmem [shape: f32[16,32], index: 0, kind: input, shape index: {}]
  %s1 = inlined_call_operand.vmem [shape: f32[208,32], index: 1, kind: input, shape index: {}]
  %s2 = inlined_call_operand.hbm [shape: f32[16,32], index: 2, kind: output, shape index: {}]
  %s3 = sld [smem:[#allocation0]]
  $region18: #{tpu_custom_call.1} parent=0
    _
  %s5 = ssub.s32 1, %s3
  %s6 = scalar_select 0, %s5, %s3
  $region1: #{tpu_custom_call.1} parent=0
    #allocation2 [shape = 'u8[8192]{0}', space=vmem, size = 0x2000, scoped, tag = 'output window, operand 0, single buffered']
    #allocation3 [shape = 's32[1]{0}', space=sflag, size = 0x4, scoped, tag = 'scoped memory for tpu_custom_call.1']
    %7 = vsyncpa [#allocation3], 0
    // Predicated region
    $region2: #{tpu_custom_call.1} parent=1 // pred_check
      _
    $region3: #{tpu_custom_call.1} parent=1 // pred_check_branch
      %9 = sbr.rel (0) target = $region5
    $region4: #{tpu_custom_call.1} parent=1 // pred_region
      _
    $region5: #{tpu_custom_call.1} parent=1 // pred_fallthru
      _
    // Predicated region
    $region6: #{tpu_custom_call.1} parent=1 // pred_check
      _
    $region7: #{tpu_custom_call.1} parent=1 // pred_check_branch
      %11 = sbr.rel (0) target = $region9
    $region8: #{tpu_custom_call.1} parent=1 // pred_region
      _
    $region9: #{tpu_custom_call.1} parent=1 // pred_fallthru
      _
    %v12 = vld [vmem:[%s0] sm:$0xff]
    %v13 = vld [vmem:[%s0 + $0x8] sm:$0xff]
    %v14 = vld [vmem:[%s1] sm:$0xff]
    %v15 = vld [vmem:[%s1 + $0x8] sm:$0xff]
    %v16 = vld [vmem:[%s1 + $0x10] sm:$0xff]
    %v17 = vld [vmem:[%s1 + $0x18] sm:$0xff]
    %v18 = vld [vmem:[%s1 + $0x20] sm:$0xff]
    %v19 = vld [vmem:[%s1 + $0x28] sm:$0xff]
    %v20 = vld [vmem:[%s1 + $0x30] sm:$0xff]
    %v21 = vld [vmem:[%s1 + $0x38] sm:$0xff]
    %v22 = vld [vmem:[%s1 + $0x40] sm:$0xff]
    %v23 = vld [vmem:[%s1 + $0x48] sm:$0xff]
    %v24 = vld [vmem:[%s1 + $0x50] sm:$0xff]
    %v25 = vld [vmem:[%s1 + $0x58] sm:$0xff]
    %v26 = vld [vmem:[%s1 + $0x60] sm:$0xff]
    %v27 = vld [vmem:[%s1 + $0x68] sm:$0xff]
    %v28 = vld [vmem:[%s1 + $0x70] sm:$0xff]
    %v29 = vld [vmem:[%s1 + $0x78] sm:$0xff]
    %v30 = vld [vmem:[%s1 + $0x80] sm:$0xff]
    %v31 = vld [vmem:[%s1 + $0x88] sm:$0xff]
    %v32 = vld [vmem:[%s1 + $0x90] sm:$0xff]
    %v33 = vld [vmem:[%s1 + $0x98] sm:$0xff]
    %v34 = vld [vmem:[%s1 + $0xa0] sm:$0xff]
    %v35 = vld [vmem:[%s1 + $0xa8] sm:$0xff]
    %v36 = vld [vmem:[%s1 + $0xb0] sm:$0xff]
    %v37 = vld [vmem:[%s1 + $0xb8] sm:$0xff]
    %v38 = vld [vmem:[%s1 + $0xc0] sm:$0xff]
    %v39 = vld [vmem:[%s1 + $0xc8] sm:$0xff]
    %vm40 = vcmask 261120
    %v41 = vsel %vm40, %v12, 0.0
    %42 = vadd.xlane.f32.xlu0 %v41
    %v43 = vpop.xlane.xlu0 %42
    %v44 = vsel %vm40, %v13, 0.0
    %45 = vadd.xlane.f32.xlu0 %v44
    %v46 = vpop.xlane.xlu0 %45
    %v47 = vrcp.pop 32.0
    %v48 = vmul.f32 %v43, %v47
    %v49 = vmul.f32 %v46, %v47
    %v50 = vsub.f32 %v12, %v48
    %v51 = vsub.f32 %v13, %v49
    %v52 = vmul.f32 %v50, %v50
    %v53 = vmul.f32 %v51, %v51
    %v54 = vsel %vm40, %v52, 0.0
    %55 = vadd.xlane.f32.xlu0 %v54
    %v56 = vpop.xlane.xlu0 %55
    %v57 = vsel %vm40, %v53, 0.0
    %58 = vadd.xlane.f32.xlu0 %v57
    %v59 = vpop.xlane.xlu0 %58
    %v60 = vmul.f32 %v56, %v47
    %v61 = vmul.f32 %v59, %v47
    %v62 = vadd.f32 %v60, 1e-05
    %v63 = vadd.f32 %v61, 1e-05
    %v64 = vrsqrt.pop %v62
    %v65 = vrsqrt.pop %v63
    %v66 = vmul.f32 %v50, %v64
    %v67 = vmul.f32 %v51, %v65
    %v68 = vlaneseq
    %v69 = vshrl.u32 %v68, 7
    %v70 = vsub.s32 4, %v69
    %v71 = vrot.slane %v38, %v70
    %v72 = vmul.f32 %v66, %v71
    %v73 = vmul.f32 %v67, %v71
    %v74 = vlaneseq
    %v75 = vshrl.u32 %v74, 7
    %v76 = vsub.s32 5, %v75
    %v77 = vrot.slane %v38, %v76
    %v78 = vadd.f32 %v72, %v77
    %v79 = vadd.f32 %v73, %v77
    %v80 = vlaneseq
    %v81 = vshrl.u32 %v80, 7
    %v82 = vadd.s32 %v81, 8
    %v83 = vlaneseq
    %v84 = vand.u32 %v83, 127
    %v85 = vand.u32 %v81, 4294967288
    %v86 = vand.u32 %v82, 4294967288
    %v87 = vand.u32 %v84, 4294967288
    %vm88 = vcmp.eq.s32.totalorder %v85, %v87
    %vm89 = vcmp.eq.s32.totalorder %v86, %v87
    %vm90 = vcmp.le.s32.totalorder %v84, %v81
    %vm91 = vcmp.le.s32.totalorder %v84, %v82
    %vm92 = vmand %vm88, %vm90
    %vm93 = vmand %vm89, %vm91
    %v94 = vsel %vm92, 0.0, -1e+30
    %v95 = vsel %vm93, 0.0, -1e+30
    %v97 = vsel %vm40, %v12, 0
    %v100 = vsel %vm40, %v13, 0
    %v103 = vsel %vm40, %v14, 0
    %v106 = vsel %vm40, %v15, 0
    %v109 = vsel %vm40, %v16, 0
    %v112 = vsel %vm40, %v17, 0
    %v115 = vsel %vm40, %v18, 0
    %v118 = vsel %vm40, %v19, 0
    %v121 = vsel %vm40, %v20, 0
    %v124 = vsel %vm40, %v21, 0
    %v127 = vsel %vm40, %v22, 0
    %v130 = vsel %vm40, %v23, 0
    %v133 = vsel %vm40, %v24, 0
    %v136 = vsel %vm40, %v25, 0
    %138 = vmatprep.subr.mxu0 0.0
    %139 = vmatpush1.xpose.msra.mxu0 %v103
    %140 = vmatprep.subr.mxu0 0.0
    %141 = vmatpush1.xpose.msra.mxu0 %v106
    %142 = vmatprep.subr.mxu0 0.0
    %143 = vmatpush1.xpose.msra.mxu0 %v109
    %144 = vmatprep.subr.mxu0 0.0
    %145 = vmatpush1.xpose.msra.mxu0 %v112
    %146 = vmatprep.subr.mxu0 0.0
    %147 = vmatpush1.xpose.msra.mxu0 %v115
    %148 = vmatprep.subr.mxu0 0.0
    %149 = vmatpush1.xpose.msra.mxu0 %v118
    %150 = vmatprep.subr.mxu0 0.0
    %151 = vmatpush1.xpose.msra.mxu0 %v121
    %152 = vmatprep.subr.mxu0 0.0
    %153 = vmatpush1.xpose.msra.mxu0 %v124
    %154 = vmatprep.subr.mxu0 0.0
    %155 = vmatpush1.xpose.msra.mxu0 %v127
    %156 = vmatprep.subr.mxu0 0.0
    %157 = vmatpush1.xpose.msra.mxu0 %v130
    %158 = vmatprep.subr.mxu0 0.0
    %159 = vmatpush1.xpose.msra.mxu0 %v133
    %160 = vmatprep.subr.mxu0 0.0
    %161 = vmatpush1.xpose.msra.mxu0 %v136
    %162 = vmatprep.subr.mxu0 0.0
    %163 = vmatpush1.xpose.msra.mxu0 0.0
    %164 = vmatprep.subr.mxu0 0.0
    %165 = vmatpush1.xpose.msra.mxu0 0.0
    %166 = vmatprep.subr.mxu0 0.0
    %167 = vmatpush1.xpose.msra.mxu0 0.0
    %168 = vmatprep.subr.mxu0 0.0
    %169 = vmatpush1.xpose.msra.mxu0 0.0
    %170 = vmatprep.subr.mxu0 0.0
    %171 = vmatpush1.xpose.msra.mxu0 0.0
    %172 = vmatprep.subr.mxu0 0.0
    %173 = vmatpush1.xpose.msra.mxu0 0.0
    %174 = vmatprep.subr.mxu0 0.0
    %175 = vmatpush1.xpose.msra.mxu0 0.0
    %176 = vmatprep.subr.mxu0 0.0
    %177 = vmatpush1.xpose.msra.mxu0 0.0
    %178 = vmatprep.subr.mxu0 0.0
    %179 = vmatpush1.xpose.msra.mxu0 0.0
    %180 = vmatprep.subr.mxu0 0.0
    %181 = vmatpush1.xpose.msra.mxu0 0.0
    %182 = vmatprep.subr.mxu0 0.0
    %183 = vmatpush1.xpose.msra.mxu0 0.0
    %184 = vmatprep.subr.mxu0 0.0
    %185 = vmatpush1.xpose.msra.mxu0 0.0
    %186 = vmatprep.subr.mxu0 0.0
    %187 = vmatpush1.xpose.msra.mxu0 0.0
    %188 = vmatprep.subr.mxu0 0.0
    %189 = vmatpush1.xpose.msra.mxu0 0.0
    %190 = vmatprep.subr.mxu0 0.0
    %191 = vmatpush1.xpose.msra.mxu0 0.0
    %192 = vmatprep.subr.mxu0 0.0
    %193 = vmatpush1.xpose.msra.mxu0 0.0
    %194 = vmatprep.subr.mxu0 0.0
    %195 = vmatpush1.xpose.msra.mxu0 0.0
    %196 = vmatprep.subr.mxu0 0.0
    %197 = vmatpush1.xpose.msra.mxu0 0.0
    %198 = vmatprep.subr.mxu0 0.0
    %199 = vmatpush1.xpose.msra.mxu0 0.0
    %200 = vmatprep.subr.mxu0 0.0
    %201 = vmatpush1.xpose.msra.mxu0 0.0
    %202 = vmatprep.mubr.f32.mxu0 0.0
    %203 = vmatmul.mubr.f32.gmra.mrb[0].mxu0 %v97
    %v204 = vpop.f32.mrb[0].mxu0
    %v205 = vadd.f32 0.0, %v204
    %v206 = vpop.f32.mrb[0].mxu0
    %207 = vmatprep.mubr.f32.mxu0 0.0
    %208 = vmatmul.mubr.f32.gmra.mrb[0].mxu0 %v100
    %v209 = vpop.f32.mrb[0].mxu0
    %v210 = vadd.f32 0.0, %v209
    %v211 = vpop.f32.mrb[0].mxu0
    %212 = vdwg.mxu0
    %v213 = vlaneseq
    %v214 = vshrl.u32 %v213, 7
    %v215 = vsub.s32 0, %v214
    %v216 = vrot.slane %v38, %v215
    %v217 = vadd.f32 %v205, %v216
    %v218 = vadd.f32 %v210, %v216
    %v219 = vlaneseq
    %v220 = vshrl.u32 %v219, 7
    %v221 = vsub.s32 1, %v220
    %v222 = vrot.slane %v38, %v221
    %224 = vrot.lane.b32.xlu0 %v222, 32
    %v225 = vpop.permute.xlu0 %224
    %v227 = vadd.f32 %v205, %v225
    %v228 = vadd.f32 %v210, %v225
    %v229 = vlaneseq
    %v230 = vshrl.u32 %v229, 7
    %v231 = vsub.s32 2, %v230
    %v232 = vrot.slane %v38, %v231
    %234 = vrot.lane.b32.xlu0 %v232, 64
    %v235 = vpop.permute.xlu0 %234
    %v237 = vadd.f32 %v205, %v235
    %v238 = vadd.f32 %v210, %v235
    %241 = vrot.lane.b32.xlu0 %v227, 96
    %v242 = vpop.permute.xlu0 %241
    %243 = vrot.lane.b32.xlu0 %v228, 96
    %v244 = vpop.permute.xlu0 %243
    %vm245 = vcmask 64512
    %v247 = vsel %vm245, %v217, 0
    %v250 = vsel %vm245, %v218, 0
    %v252 = vsel %vm245, %v242, 0
    %v254 = vsel %vm245, %v244, 0
    %256 = vmatprep.subr.mxu0 0.0
    %257 = vmatpush1.xpose.msra.mxu0 %v252
    %258 = vmatprep.subr.mxu0 0.0
    %259 = vmatpush1.xpose.msra.mxu0 %v254
    %260 = vmatprep.subr.mxu0 0.0
    %261 = vmatpush1.xpose.msra.mxu0 0.0
    %262 = vmatprep.subr.mxu0 0.0
    %263 = vmatpush1.xpose.msra.mxu0 0.0
    %264 = vmatprep.subr.mxu0 0.0
    %265 = vmatpush1.xpose.msra.mxu0 0.0
    %266 = vmatprep.subr.mxu0 0.0
    %267 = vmatpush1.xpose.msra.mxu0 0.0
    %268 = vmatprep.subr.mxu0 0.0
    %269 = vmatpush1.xpose.msra.mxu0 0.0
    %270 = vmatprep.subr.mxu0 0.0
    %271 = vmatpush1.xpose.msra.mxu0 0.0
    %272 = vmatprep.subr.mxu0 0.0
    %273 = vmatpush1.xpose.msra.mxu0 0.0
    %274 = vmatprep.subr.mxu0 0.0
    %275 = vmatpush1.xpose.msra.mxu0 0.0
    %276 = vmatprep.subr.mxu0 0.0
    %277 = vmatpush1.xpose.msra.mxu0 0.0
    %278 = vmatprep.subr.mxu0 0.0
    %279 = vmatpush1.xpose.msra.mxu0 0.0
    %280 = vmatprep.subr.mxu0 0.0
    %281 = vmatpush1.xpose.msra.mxu0 0.0
    %282 = vmatprep.subr.mxu0 0.0
    %283 = vmatpush1.xpose.msra.mxu0 0.0
    %284 = vmatprep.subr.mxu0 0.0
    %285 = vmatpush1.xpose.msra.mxu0 0.0
    %286 = vmatprep.subr.mxu0 0.0
    %287 = vmatpush1.xpose.msra.mxu0 0.0
    %288 = vmatprep.subr.mxu0 0.0
    %289 = vmatpush1.xpose.msra.mxu0 0.0
    %290 = vmatprep.subr.mxu0 0.0
    %291 = vmatpush1.xpose.msra.mxu0 0.0
    %292 = vmatprep.subr.mxu0 0.0
    %293 = vmatpush1.xpose.msra.mxu0 0.0
    %294 = vmatprep.subr.mxu0 0.0
    %295 = vmatpush1.xpose.msra.mxu0 0.0
    %296 = vmatprep.subr.mxu0 0.0
    %297 = vmatpush1.xpose.msra.mxu0 0.0
    %298 = vmatprep.subr.mxu0 0.0
    %299 = vmatpush1.xpose.msra.mxu0 0.0
    %300 = vmatprep.subr.mxu0 0.0
    %301 = vmatpush1.xpose.msra.mxu0 0.0
    %302 = vmatprep.subr.mxu0 0.0
    %303 = vmatpush1.xpose.msra.mxu0 0.0
    %304 = vmatprep.subr.mxu0 0.0
    %305 = vmatpush1.xpose.msra.mxu0 0.0
    %306 = vmatprep.subr.mxu0 0.0
    %307 = vmatpush1.xpose.msra.mxu0 0.0
    %308 = vmatprep.subr.mxu0 0.0
    %309 = vmatpush1.xpose.msra.mxu0 0.0
    %310 = vmatprep.subr.mxu0 0.0
    %311 = vmatpush1.xpose.msra.mxu0 0.0
    %312 = vmatprep.subr.mxu0 0.0
    %313 = vmatpush1.xpose.msra.mxu0 0.0
    %314 = vmatprep.subr.mxu0 0.0
    %315 = vmatpush1.xpose.msra.mxu0 0.0
    %316 = vmatprep.subr.mxu0 0.0
    %317 = vmatpush1.xpose.msra.mxu0 0.0
    %318 = vmatprep.subr.mxu0 0.0
    %319 = vmatpush1.xpose.msra.mxu0 0.0
    %320 = vmatprep.mubr.f32.mxu0 0.0
    %321 = vmatmul.mubr.f32.gmra.mrb[0].mxu0 %v247
    %v322 = vpop.f32.mrb[0].mxu0
    %v323 = vadd.f32 0.0, %v322
    %v324 = vpop.f32.mrb[0].mxu0
    %325 = vmatprep.mubr.f32.mxu0 0.0
    %326 = vmatmul.mubr.f32.gmra.mrb[0].mxu0 %v250
    %v327 = vpop.f32.mrb[0].mxu0
    %v328 = vadd.f32 0.0, %v327
    %v329 = vpop.f32.mrb[0].mxu0
    %330 = vdwg.mxu0
    %v331 = vmul.f32 %v323, 0.35355338
    %v332 = vmul.f32 %v328, 0.35355338
    %v333 = vadd.f32 %v331, %v94
    %v334 = vadd.f32 %v332, %v95
    %vm335 = vcmask 130048
    %v336 = vsel %vm335, %v333, -inf
    %337 = vmax.xlane.f32.xlu0 %v336
    %v338 = vpop.xlane.xlu0 %337
    %v339 = vsel %vm335, %v334, -inf
    %340 = vmax.xlane.f32.xlu0 %v339
    %v341 = vpop.xlane.xlu0 %340
    %v342 = vsub.f32 %v333, %v338
    %v343 = vsub.f32 %v334, %v341
    %v344 = vmul.f32 %v342, 1.442695
    %v345 = vpow.pop %v344
    %v346 = vmul.f32 %v343, 1.442695
    %v347 = vpow.pop %v346
    %v348 = vsel %vm335, %v345, 0.0
    %349 = vadd.xlane.f32.xlu0 %v348
    %v350 = vpop.xlane.xlu0 %349
    %v351 = vsel %vm335, %v347, 0.0
    %352 = vadd.xlane.f32.xlu0 %v351
    %v353 = vpop.xlane.xlu0 %352
    %v354 = vrcp.pop %v350
    %v355 = vrcp.pop %v353
    %v356 = vmul.f32 %v345, %v354
    %v357 = vmul.f32 %v347, %v355
    %360 = vrot.lane.b32.xlu0 %v237, 64
    %v361 = vpop.permute.xlu0 %360
    %362 = vrot.lane.b32.xlu0 %v238, 64
    %v363 = vpop.permute.xlu0 %362
    %v367 = vsel %vm335, %v356, 0
    %v370 = vsel %vm335, %v357, 0
    %372 = vmatprep.subr.mxu0 0.0
    %373 = vmatpush1.msra.mxu0 %v361
    %374 = vmatprep.subr.mxu0 0.0
    %375 = vmatpush1.msra.mxu0 %v363
    %376 = vmatprep.subr.mxu0 0.0
    %377 = vmatpush1.msra.mxu0 0.0
    %378 = vmatprep.subr.mxu0 0.0
    %379 = vmatpush1.msra.mxu0 0.0
    %380 = vmatprep.subr.mxu0 0.0
    %381 = vmatpush1.msra.mxu0 0.0
    %382 = vmatprep.subr.mxu0 0.0
    %383 = vmatpush1.msra.mxu0 0.0
    %384 = vmatprep.subr.mxu0 0.0
    %385 = vmatpush1.msra.mxu0 0.0
    %386 = vmatprep.subr.mxu0 0.0
    %387 = vmatpush1.msra.mxu0 0.0
    %388 = vmatprep.subr.mxu0 0.0
    %389 = vmatpush1.msra.mxu0 0.0
    %390 = vmatprep.subr.mxu0 0.0
    %391 = vmatpush1.msra.mxu0 0.0
    %392 = vmatprep.subr.mxu0 0.0
    %393 = vmatpush1.msra.mxu0 0.0
    %394 = vmatprep.subr.mxu0 0.0
    %395 = vmatpush1.msra.mxu0 0.0
    %396 = vmatprep.subr.mxu0 0.0
    %397 = vmatpush1.msra.mxu0 0.0
    %398 = vmatprep.subr.mxu0 0.0
    %399 = vmatpush1.msra.mxu0 0.0
    %400 = vmatprep.subr.mxu0 0.0
    %401 = vmatpush1.msra.mxu0 0.0
    %402 = vmatprep.subr.mxu0 0.0
    %403 = vmatpush1.msra.mxu0 0.0
    %404 = vmatprep.subr.mxu0 0.0
    %405 = vmatpush1.msra.mxu0 0.0
    %406 = vmatprep.subr.mxu0 0.0
    %407 = vmatpush1.msra.mxu0 0.0
    %408 = vmatprep.subr.mxu0 0.0
    %409 = vmatpush1.msra.mxu0 0.0
    %410 = vmatprep.subr.mxu0 0.0
    %411 = vmatpush1.msra.mxu0 0.0
    %412 = vmatprep.subr.mxu0 0.0
    %413 = vmatpush1.msra.mxu0 0.0
    %414 = vmatprep.subr.mxu0 0.0
    %415 = vmatpush1.msra.mxu0 0.0
    %416 = vmatprep.subr.mxu0 0.0
    %417 = vmatpush1.msra.mxu0 0.0
    %418 = vmatprep.subr.mxu0 0.0
    %419 = vmatpush1.msra.mxu0 0.0
    %420 = vmatprep.subr.mxu0 0.0
    %421 = vmatpush1.msra.mxu0 0.0
    %422 = vmatprep.subr.mxu0 0.0
    %423 = vmatpush1.msra.mxu0 0.0
    %424 = vmatprep.subr.mxu0 0.0
    %425 = vmatpush1.msra.mxu0 0.0
    %426 = vmatprep.subr.mxu0 0.0
    %427 = vmatpush1.msra.mxu0 0.0
    %428 = vmatprep.subr.mxu0 0.0
    %429 = vmatpush1.msra.mxu0 0.0
    %430 = vmatprep.subr.mxu0 0.0
    %431 = vmatpush1.msra.mxu0 0.0
    %432 = vmatprep.subr.mxu0 0.0
    %433 = vmatpush1.msra.mxu0 0.0
    %434 = vmatprep.subr.mxu0 0.0
    %435 = vmatpush1.msra.mxu0 0.0
    %436 = vmatprep.mubr.f32.mxu0 0.0
    %437 = vmatmul.mubr.f32.gmra.mrb[0].mxu0 %v367
    %v438 = vpop.f32.mrb[0].mxu0
    %v439 = vadd.f32 0.0, %v438
    %v440 = vpop.f32.mrb[0].mxu0
    %441 = vmatprep.mubr.f32.mxu0 0.0
    %442 = vmatmul.mubr.f32.gmra.mrb[0].mxu0 %v370
    %v443 = vpop.f32.mrb[0].mxu0
    %v444 = vadd.f32 0.0, %v443
    %v445 = vpop.f32.mrb[0].mxu0
    %446 = vdwg.mxu0
    %447 = vrot.lane.b32.xlu0 %v217, 120
    %v448 = vpop.permute.xlu0 %447
    %449 = vrot.lane.b32.xlu0 %v218, 120
    %v450 = vpop.permute.xlu0 %449
    %451 = vrot.lane.b32.xlu0 %v227, 88
    %v452 = vpop.permute.xlu0 %451
    %453 = vrot.lane.b32.xlu0 %v228, 88
    %v454 = vpop.permute.xlu0 %453
    %v455 = vsel %vm245, %v448, 0
    %v457 = vsel %vm245, %v450, 0
    %v459 = vsel %vm245, %v452, 0
    %v461 = vsel %vm245, %v454, 0
    %463 = vmatprep.subr.mxu0 0.0
    %464 = vmatpush1.xpose.msra.mxu0 %v459
    %465 = vmatprep.subr.mxu0 0.0
    %466 = vmatpush1.xpose.msra.mxu0 %v461
    %467 = vmatprep.subr.mxu0 0.0
    %468 = vmatpush1.xpose.msra.mxu0 0.0
    %469 = vmatprep.subr.mxu0 0.0
    %470 = vmatpush1.xpose.msra.mxu0 0.0
    %471 = vmatprep.subr.mxu0 0.0
    %472 = vmatpush1.xpose.msra.mxu0 0.0
    %473 = vmatprep.subr.mxu0 0.0
    %474 = vmatpush1.xpose.msra.mxu0 0.0
    %475 = vmatprep.subr.mxu0 0.0
    %476 = vmatpush1.xpose.msra.mxu0 0.0
    %477 = vmatprep.subr.mxu0 0.0
    %478 = vmatpush1.xpose.msra.mxu0 0.0
    %479 = vmatprep.subr.mxu0 0.0
    %480 = vmatpush1.xpose.msra.mxu0 0.0
    %481 = vmatprep.subr.mxu0 0.0
    %482 = vmatpush1.xpose.msra.mxu0 0.0
    %483 = vmatprep.subr.mxu0 0.0
    %484 = vmatpush1.xpose.msra.mxu0 0.0
    %485 = vmatprep.subr.mxu0 0.0
    %486 = vmatpush1.xpose.msra.mxu0 0.0
    %487 = vmatprep.subr.mxu0 0.0
    %488 = vmatpush1.xpose.msra.mxu0 0.0
    %489 = vmatprep.subr.mxu0 0.0
    %490 = vmatpush1.xpose.msra.mxu0 0.0
    %491 = vmatprep.subr.mxu0 0.0
    %492 = vmatpush1.xpose.msra.mxu0 0.0
    %493 = vmatprep.subr.mxu0 0.0
    %494 = vmatpush1.xpose.msra.mxu0 0.0
    %495 = vmatprep.subr.mxu0 0.0
    %496 = vmatpush1.xpose.msra.mxu0 0.0
    %497 = vmatprep.subr.mxu0 0.0
    %498 = vmatpush1.xpose.msra.mxu0 0.0
    %499 = vmatprep.subr.mxu0 0.0
    %500 = vmatpush1.xpose.msra.mxu0 0.0
    %501 = vmatprep.subr.mxu0 0.0
    %502 = vmatpush1.xpose.msra.mxu0 0.0
    %503 = vmatprep.subr.mxu0 0.0
    %504 = vmatpush1.xpose.msra.mxu0 0.0
    %505 = vmatprep.subr.mxu0 0.0
    %506 = vmatpush1.xpose.msra.mxu0 0.0
    %507 = vmatprep.subr.mxu0 0.0
    %508 = vmatpush1.xpose.msra.mxu0 0.0
    %509 = vmatprep.subr.mxu0 0.0
    %510 = vmatpush1.xpose.msra.mxu0 0.0
    %511 = vmatprep.subr.mxu0 0.0
    %512 = vmatpush1.xpose.msra.mxu0 0.0
    %513 = vmatprep.subr.mxu0 0.0
    %514 = vmatpush1.xpose.msra.mxu0 0.0
    %515 = vmatprep.subr.mxu0 0.0
    %516 = vmatpush1.xpose.msra.mxu0 0.0
    %517 = vmatprep.subr.mxu0 0.0
    %518 = vmatpush1.xpose.msra.mxu0 0.0
    %519 = vmatprep.subr.mxu0 0.0
    %520 = vmatpush1.xpose.msra.mxu0 0.0
    %521 = vmatprep.subr.mxu0 0.0
    %522 = vmatpush1.xpose.msra.mxu0 0.0
    %523 = vmatprep.subr.mxu0 0.0
    %524 = vmatpush1.xpose.msra.mxu0 0.0
    %525 = vmatprep.subr.mxu0 0.0
    %526 = vmatpush1.xpose.msra.mxu0 0.0
    %527 = vmatprep.mubr.f32.mxu0 0.0
    %528 = vmatmul.mubr.f32.gmra.mrb[0].mxu0 %v455
    %v529 = vpop.f32.mrb[0].mxu0
    %v530 = vadd.f32 0.0, %v529
    %v531 = vpop.f32.mrb[0].mxu0
    %532 = vmatprep.mubr.f32.mxu0 0.0
    %533 = vmatmul.mubr.f32.gmra.mrb[0].mxu0 %v457
    %v534 = vpop.f32.mrb[0].mxu0
    %v535 = vadd.f32 0.0, %v534
    %v536 = vpop.f32.mrb[0].mxu0
    %537 = vdwg.mxu0
    %v538 = vmul.f32 %v530, 0.35355338
    %v539 = vmul.f32 %v535, 0.35355338
    %v540 = vadd.f32 %v538, %v94
    %v541 = vadd.f32 %v539, %v95
    %v542 = vsel %vm335, %v540, -inf
    %543 = vmax.xlane.f32.xlu0 %v542
    %v544 = vpop.xlane.xlu0 %543
    %v545 = vsel %vm335, %v541, -inf
    %546 = vmax.xlane.f32.xlu0 %v545
    %v547 = vpop.xlane.xlu0 %546
    %v548 = vsub.f32 %v540, %v544
    %v549 = vsub.f32 %v541, %v547
    %v550 = vmul.f32 %v548, 1.442695
    %v551 = vpow.pop %v550
    %v552 = vmul.f32 %v549, 1.442695
    %v553 = vpow.pop %v552
    %v554 = vsel %vm335, %v551, 0.0
    %555 = vadd.xlane.f32.xlu0 %v554
    %v556 = vpop.xlane.xlu0 %555
    %v557 = vsel %vm335, %v553, 0.0
    %558 = vadd.xlane.f32.xlu0 %v557
    %v559 = vpop.xlane.xlu0 %558
    %v560 = vrcp.pop %v556
    %v561 = vrcp.pop %v559
    %v562 = vmul.f32 %v551, %v560
    %v563 = vmul.f32 %v553, %v561
    %564 = vrot.lane.b32.xlu0 %v237, 56
    %v565 = vpop.permute.xlu0 %564
    %566 = vrot.lane.b32.xlu0 %v238, 56
    %v567 = vpop.permute.xlu0 %566
    %v571 = vsel %vm335, %v562, 0
    %v574 = vsel %vm335, %v563, 0
    %576 = vmatprep.subr.mxu0 0.0
    %577 = vmatpush1.msra.mxu0 %v565
    %578 = vmatprep.subr.mxu0 0.0
    %579 = vmatpush1.msra.mxu0 %v567
    %580 = vmatprep.subr.mxu0 0.0
    %581 = vmatpush1.msra.mxu0 0.0
    %582 = vmatprep.subr.mxu0 0.0
    %583 = vmatpush1.msra.mxu0 0.0
    %584 = vmatprep.subr.mxu0 0.0
    %585 = vmatpush1.msra.mxu0 0.0
    %586 = vmatprep.subr.mxu0 0.0
    %587 = vmatpush1.msra.mxu0 0.0
    %588 = vmatprep.subr.mxu0 0.0
    %589 = vmatpush1.msra.mxu0 0.0
    %590 = vmatprep.subr.mxu0 0.0
    %591 = vmatpush1.msra.mxu0 0.0
    %592 = vmatprep.subr.mxu0 0.0
    %593 = vmatpush1.msra.mxu0 0.0
    %594 = vmatprep.subr.mxu0 0.0
    %595 = vmatpush1.msra.mxu0 0.0
    %596 = vmatprep.subr.mxu0 0.0
    %597 = vmatpush1.msra.mxu0 0.0
    %598 = vmatprep.subr.mxu0 0.0
    %599 = vmatpush1.msra.mxu0 0.0
    %600 = vmatprep.subr.mxu0 0.0
    %601 = vmatpush1.msra.mxu0 0.0
    %602 = vmatprep.subr.mxu0 0.0
    %603 = vmatpush1.msra.mxu0 0.0
    %604 = vmatprep.subr.mxu0 0.0
    %605 = vmatpush1.msra.mxu0 0.0
    %606 = vmatprep.subr.mxu0 0.0
    %607 = vmatpush1.msra.mxu0 0.0
    %608 = vmatprep.subr.mxu0 0.0
    %609 = vmatpush1.msra.mxu0 0.0
    %610 = vmatprep.subr.mxu0 0.0
    %611 = vmatpush1.msra.mxu0 0.0
    %612 = vmatprep.subr.mxu0 0.0
    %613 = vmatpush1.msra.mxu0 0.0
    %614 = vmatprep.subr.mxu0 0.0
    %615 = vmatpush1.msra.mxu0 0.0
    %616 = vmatprep.subr.mxu0 0.0
    %617 = vmatpush1.msra.mxu0 0.0
    %618 = vmatprep.subr.mxu0 0.0
    %619 = vmatpush1.msra.mxu0 0.0
    %620 = vmatprep.subr.mxu0 0.0
    %621 = vmatpush1.msra.mxu0 0.0
    %622 = vmatprep.subr.mxu0 0.0
    %623 = vmatpush1.msra.mxu0 0.0
    %624 = vmatprep.subr.mxu0 0.0
    %625 = vmatpush1.msra.mxu0 0.0
    %626 = vmatprep.subr.mxu0 0.0
    %627 = vmatpush1.msra.mxu0 0.0
    %628 = vmatprep.subr.mxu0 0.0
    %629 = vmatpush1.msra.mxu0 0.0
    %630 = vmatprep.subr.mxu0 0.0
    %631 = vmatpush1.msra.mxu0 0.0
    %632 = vmatprep.subr.mxu0 0.0
    %633 = vmatpush1.msra.mxu0 0.0
    %634 = vmatprep.subr.mxu0 0.0
    %635 = vmatpush1.msra.mxu0 0.0
    %636 = vmatprep.subr.mxu0 0.0
    %637 = vmatpush1.msra.mxu0 0.0
    %638 = vmatprep.subr.mxu0 0.0
    %639 = vmatpush1.msra.mxu0 0.0
    %640 = vmatprep.mubr.f32.mxu0 0.0
    %641 = vmatmul.mubr.f32.gmra.mrb[0].mxu0 %v571
    %v642 = vpop.f32.mrb[0].mxu0
    %v643 = vadd.f32 0.0, %v642
    %v644 = vpop.f32.mrb[0].mxu0
    %645 = vmatprep.mubr.f32.mxu0 0.0
    %646 = vmatmul.mubr.f32.gmra.mrb[0].mxu0 %v574
    %v647 = vpop.f32.mrb[0].mxu0
    %v648 = vadd.f32 0.0, %v647
    %v649 = vpop.f32.mrb[0].mxu0
    %650 = vdwg.mxu0
    %651 = vrot.lane.b32.xlu0 %v217, 112
    %v652 = vpop.permute.xlu0 %651
    %653 = vrot.lane.b32.xlu0 %v218, 112
    %v654 = vpop.permute.xlu0 %653
    %655 = vrot.lane.b32.xlu0 %v227, 80
    %v656 = vpop.permute.xlu0 %655
    %657 = vrot.lane.b32.xlu0 %v228, 80
    %v658 = vpop.permute.xlu0 %657
    %v659 = vsel %vm245, %v652, 0
    %v661 = vsel %vm245, %v654, 0
    %v663 = vsel %vm245, %v656, 0
    %v665 = vsel %vm245, %v658, 0
    %667 = vmatprep.subr.mxu0 0.0
    %668 = vmatpush1.xpose.msra.mxu0 %v663
    %669 = vmatprep.subr.mxu0 0.0
    %670 = vmatpush1.xpose.msra.mxu0 %v665
    %671 = vmatprep.subr.mxu0 0.0
    %672 = vmatpush1.xpose.msra.mxu0 0.0
    %673 = vmatprep.subr.mxu0 0.0
    %674 = vmatpush1.xpose.msra.mxu0 0.0
    %675 = vmatprep.subr.mxu0 0.0
    %676 = vmatpush1.xpose.msra.mxu0 0.0
    %677 = vmatprep.subr.mxu0 0.0
    %678 = vmatpush1.xpose.msra.mxu0 0.0
    %679 = vmatprep.subr.mxu0 0.0
    %680 = vmatpush1.xpose.msra.mxu0 0.0
    %681 = vmatprep.subr.mxu0 0.0
    %682 = vmatpush1.xpose.msra.mxu0 0.0
    %683 = vmatprep.subr.mxu0 0.0
    %684 = vmatpush1.xpose.msra.mxu0 0.0
    %685 = vmatprep.subr.mxu0 0.0
    %686 = vmatpush1.xpose.msra.mxu0 0.0
    %687 = vmatprep.subr.mxu0 0.0
    %688 = vmatpush1.xpose.msra.mxu0 0.0
    %689 = vmatprep.subr.mxu0 0.0
    %690 = vmatpush1.xpose.msra.mxu0 0.0
    %691 = vmatprep.subr.mxu0 0.0
    %692 = vmatpush1.xpose.msra.mxu0 0.0
    %693 = vmatprep.subr.mxu0 0.0
    %694 = vmatpush1.xpose.msra.mxu0 0.0
    %695 = vmatprep.subr.mxu0 0.0
    %696 = vmatpush1.xpose.msra.mxu0 0.0
    %697 = vmatprep.subr.mxu0 0.0
    %698 = vmatpush1.xpose.msra.mxu0 0.0
    %699 = vmatprep.subr.mxu0 0.0
    %700 = vmatpush1.xpose.msra.mxu0 0.0
    %701 = vmatprep.subr.mxu0 0.0
    %702 = vmatpush1.xpose.msra.mxu0 0.0
    %703 = vmatprep.subr.mxu0 0.0
    %704 = vmatpush1.xpose.msra.mxu0 0.0
    %705 = vmatprep.subr.mxu0 0.0
    %706 = vmatpush1.xpose.msra.mxu0 0.0
    %707 = vmatprep.subr.mxu0 0.0
    %708 = vmatpush1.xpose.msra.mxu0 0.0
    %709 = vmatprep.subr.mxu0 0.0
    %710 = vmatpush1.xpose.msra.mxu0 0.0
    %711 = vmatprep.subr.mxu0 0.0
    %712 = vmatpush1.xpose.msra.mxu0 0.0
    %713 = vmatprep.subr.mxu0 0.0
    %714 = vmatpush1.xpose.msra.mxu0 0.0
    %715 = vmatprep.subr.mxu0 0.0
    %716 = vmatpush1.xpose.msra.mxu0 0.0
    %717 = vmatprep.subr.mxu0 0.0
    %718 = vmatpush1.xpose.msra.mxu0 0.0
    %719 = vmatprep.subr.mxu0 0.0
    %720 = vmatpush1.xpose.msra.mxu0 0.0
    %721 = vmatprep.subr.mxu0 0.0
    %722 = vmatpush1.xpose.msra.mxu0 0.0
    %723 = vmatprep.subr.mxu0 0.0
    %724 = vmatpush1.xpose.msra.mxu0 0.0
    %725 = vmatprep.subr.mxu0 0.0
    %726 = vmatpush1.xpose.msra.mxu0 0.0
    %727 = vmatprep.subr.mxu0 0.0
    %728 = vmatpush1.xpose.msra.mxu0 0.0
    %729 = vmatprep.subr.mxu0 0.0
    %730 = vmatpush1.xpose.msra.mxu0 0.0
    %731 = vmatprep.mubr.f32.mxu0 0.0
    %732 = vmatmul.mubr.f32.gmra.mrb[0].mxu0 %v659
    %v733 = vpop.f32.mrb[0].mxu0
    %v734 = vadd.f32 0.0, %v733
    %v735 = vpop.f32.mrb[0].mxu0
    %736 = vmatprep.mubr.f32.mxu0 0.0
    %737 = vmatmul.mubr.f32.gmra.mrb[0].mxu0 %v661
    %v738 = vpop.f32.mrb[0].mxu0
    %v739 = vadd.f32 0.0, %v738
    %v740 = vpop.f32.mrb[0].mxu0
    %741 = vdwg.mxu0
    %v742 = vmul.f32 %v734, 0.35355338
    %v743 = vmul.f32 %v739, 0.35355338
    %v744 = vadd.f32 %v742, %v94
    %v745 = vadd.f32 %v743, %v95
    %v746 = vsel %vm335, %v744, -inf
    %747 = vmax.xlane.f32.xlu0 %v746
    %v748 = vpop.xlane.xlu0 %747
    %v749 = vsel %vm335, %v745, -inf
    %750 = vmax.xlane.f32.xlu0 %v749
    %v751 = vpop.xlane.xlu0 %750
    %v752 = vsub.f32 %v744, %v748
    %v753 = vsub.f32 %v745, %v751
    %v754 = vmul.f32 %v752, 1.442695
    %v755 = vpow.pop %v754
    %v756 = vmul.f32 %v753, 1.442695
    %v757 = vpow.pop %v756
    %v758 = vsel %vm335, %v755, 0.0
    %759 = vadd.xlane.f32.xlu0 %v758
    %v760 = vpop.xlane.xlu0 %759
    %v761 = vsel %vm335, %v757, 0.0
    %762 = vadd.xlane.f32.xlu0 %v761
    %v763 = vpop.xlane.xlu0 %762
    %v764 = vrcp.pop %v760
    %v765 = vrcp.pop %v763
    %v766 = vmul.f32 %v755, %v764
    %v767 = vmul.f32 %v757, %v765
    %768 = vrot.lane.b32.xlu0 %v237, 48
    %v769 = vpop.permute.xlu0 %768
    %770 = vrot.lane.b32.xlu0 %v238, 48
    %v771 = vpop.permute.xlu0 %770
    %v775 = vsel %vm335, %v766, 0
    %v778 = vsel %vm335, %v767, 0
    %780 = vmatprep.subr.mxu0 0.0
    %781 = vmatpush1.msra.mxu0 %v769
    %782 = vmatprep.subr.mxu0 0.0
    %783 = vmatpush1.msra.mxu0 %v771
    %784 = vmatprep.subr.mxu0 0.0
    %785 = vmatpush1.msra.mxu0 0.0
    %786 = vmatprep.subr.mxu0 0.0
    %787 = vmatpush1.msra.mxu0 0.0
    %788 = vmatprep.subr.mxu0 0.0
    %789 = vmatpush1.msra.mxu0 0.0
    %790 = vmatprep.subr.mxu0 0.0
    %791 = vmatpush1.msra.mxu0 0.0
    %792 = vmatprep.subr.mxu0 0.0
    %793 = vmatpush1.msra.mxu0 0.0
    %794 = vmatprep.subr.mxu0 0.0
    %795 = vmatpush1.msra.mxu0 0.0
    %796 = vmatprep.subr.mxu0 0.0
    %797 = vmatpush1.msra.mxu0 0.0
    %798 = vmatprep.subr.mxu0 0.0
    %799 = vmatpush1.msra.mxu0 0.0
    %800 = vmatprep.subr.mxu0 0.0
    %801 = vmatpush1.msra.mxu0 0.0
    %802 = vmatprep.subr.mxu0 0.0
    %803 = vmatpush1.msra.mxu0 0.0
    %804 = vmatprep.subr.mxu0 0.0
    %805 = vmatpush1.msra.mxu0 0.0
    %806 = vmatprep.subr.mxu0 0.0
    %807 = vmatpush1.msra.mxu0 0.0
    %808 = vmatprep.subr.mxu0 0.0
    %809 = vmatpush1.msra.mxu0 0.0
    %810 = vmatprep.subr.mxu0 0.0
    %811 = vmatpush1.msra.mxu0 0.0
    %812 = vmatprep.subr.mxu0 0.0
    %813 = vmatpush1.msra.mxu0 0.0
    %814 = vmatprep.subr.mxu0 0.0
    %815 = vmatpush1.msra.mxu0 0.0
    %816 = vmatprep.subr.mxu0 0.0
    %817 = vmatpush1.msra.mxu0 0.0
    %818 = vmatprep.subr.mxu0 0.0
    %819 = vmatpush1.msra.mxu0 0.0
    %820 = vmatprep.subr.mxu0 0.0
    %821 = vmatpush1.msra.mxu0 0.0
    %822 = vmatprep.subr.mxu0 0.0
    %823 = vmatpush1.msra.mxu0 0.0
    %824 = vmatprep.subr.mxu0 0.0
    %825 = vmatpush1.msra.mxu0 0.0
    %826 = vmatprep.subr.mxu0 0.0
    %827 = vmatpush1.msra.mxu0 0.0
    %828 = vmatprep.subr.mxu0 0.0
    %829 = vmatpush1.msra.mxu0 0.0
    %830 = vmatprep.subr.mxu0 0.0
    %831 = vmatpush1.msra.mxu0 0.0
    %832 = vmatprep.subr.mxu0 0.0
    %833 = vmatpush1.msra.mxu0 0.0
    %834 = vmatprep.subr.mxu0 0.0
    %835 = vmatpush1.msra.mxu0 0.0
    %836 = vmatprep.subr.mxu0 0.0
    %837 = vmatpush1.msra.mxu0 0.0
    %838 = vmatprep.subr.mxu0 0.0
    %839 = vmatpush1.msra.mxu0 0.0
    %840 = vmatprep.subr.mxu0 0.0
    %841 = vmatpush1.msra.mxu0 0.0
    %842 = vmatprep.subr.mxu0 0.0
    %843 = vmatpush1.msra.mxu0 0.0
    %844 = vmatprep.mubr.f32.mxu0 0.0
    %845 = vmatmul.mubr.f32.gmra.mrb[0].mxu0 %v775
    %v846 = vpop.f32.mrb[0].mxu0
    %v847 = vadd.f32 0.0, %v846
    %v848 = vpop.f32.mrb[0].mxu0
    %849 = vmatprep.mubr.f32.mxu0 0.0
    %850 = vmatmul.mubr.f32.gmra.mrb[0].mxu0 %v778
    %v851 = vpop.f32.mrb[0].mxu0
    %v852 = vadd.f32 0.0, %v851
    %v853 = vpop.f32.mrb[0].mxu0
    %854 = vdwg.mxu0
    %855 = vrot.lane.b32.xlu0 %v217, 104
    %v856 = vpop.permute.xlu0 %855
    %857 = vrot.lane.b32.xlu0 %v218, 104
    %v858 = vpop.permute.xlu0 %857
    %859 = vrot.lane.b32.xlu0 %v227, 72
    %v860 = vpop.permute.xlu0 %859
    %861 = vrot.lane.b32.xlu0 %v228, 72
    %v862 = vpop.permute.xlu0 %861
    %v863 = vsel %vm245, %v856, 0
    %v865 = vsel %vm245, %v858, 0
    %v867 = vsel %vm245, %v860, 0
    %v869 = vsel %vm245, %v862, 0
    %871 = vmatprep.subr.mxu0 0.0
    %872 = vmatpush1.xpose.msra.mxu0 %v867
    %873 = vmatprep.subr.mxu0 0.0
    %874 = vmatpush1.xpose.msra.mxu0 %v869
    %875 = vmatprep.subr.mxu0 0.0
    %876 = vmatpush1.xpose.msra.mxu0 0.0
    %877 = vmatprep.subr.mxu0 0.0
    %878 = vmatpush1.xpose.msra.mxu0 0.0
    %879 = vmatprep.subr.mxu0 0.0
    %880 = vmatpush1.xpose.msra.mxu0 0.0
    %881 = vmatprep.subr.mxu0 0.0
    %882 = vmatpush1.xpose.msra.mxu0 0.0
    %883 = vmatprep.subr.mxu0 0.0
    %884 = vmatpush1.xpose.msra.mxu0 0.0
    %885 = vmatprep.subr.mxu0 0.0
    %886 = vmatpush1.xpose.msra.mxu0 0.0
    %887 = vmatprep.subr.mxu0 0.0
    %888 = vmatpush1.xpose.msra.mxu0 0.0
    %889 = vmatprep.subr.mxu0 0.0
    %890 = vmatpush1.xpose.msra.mxu0 0.0
    %891 = vmatprep.subr.mxu0 0.0
    %892 = vmatpush1.xpose.msra.mxu0 0.0
    %893 = vmatprep.subr.mxu0 0.0
    %894 = vmatpush1.xpose.msra.mxu0 0.0
    %895 = vmatprep.subr.mxu0 0.0
    %896 = vmatpush1.xpose.msra.mxu0 0.0
    %897 = vmatprep.subr.mxu0 0.0
    %898 = vmatpush1.xpose.msra.mxu0 0.0
    %899 = vmatprep.subr.mxu0 0.0
    %900 = vmatpush1.xpose.msra.mxu0 0.0
    %901 = vmatprep.subr.mxu0 0.0
    %902 = vmatpush1.xpose.msra.mxu0 0.0
    %903 = vmatprep.subr.mxu0 0.0
    %904 = vmatpush1.xpose.msra.mxu0 0.0
    %905 = vmatprep.subr.mxu0 0.0
    %906 = vmatpush1.xpose.msra.mxu0 0.0
    %907 = vmatprep.subr.mxu0 0.0
    %908 = vmatpush1.xpose.msra.mxu0 0.0
    %909 = vmatprep.subr.mxu0 0.0
    %910 = vmatpush1.xpose.msra.mxu0 0.0
    %911 = vmatprep.subr.mxu0 0.0
    %912 = vmatpush1.xpose.msra.mxu0 0.0
    %913 = vmatprep.subr.mxu0 0.0
    %914 = vmatpush1.xpose.msra.mxu0 0.0
    %915 = vmatprep.subr.mxu0 0.0
    %916 = vmatpush1.xpose.msra.mxu0 0.0
    %917 = vmatprep.subr.mxu0 0.0
    %918 = vmatpush1.xpose.msra.mxu0 0.0
    %919 = vmatprep.subr.mxu0 0.0
    %920 = vmatpush1.xpose.msra.mxu0 0.0
    %921 = vmatprep.subr.mxu0 0.0
    %922 = vmatpush1.xpose.msra.mxu0 0.0
    %923 = vmatprep.subr.mxu0 0.0
    %924 = vmatpush1.xpose.msra.mxu0 0.0
    %925 = vmatprep.subr.mxu0 0.0
    %926 = vmatpush1.xpose.msra.mxu0 0.0
    %927 = vmatprep.subr.mxu0 0.0
    %928 = vmatpush1.xpose.msra.mxu0 0.0
    %929 = vmatprep.subr.mxu0 0.0
    %930 = vmatpush1.xpose.msra.mxu0 0.0
    %931 = vmatprep.subr.mxu0 0.0
    %932 = vmatpush1.xpose.msra.mxu0 0.0
    %933 = vmatprep.subr.mxu0 0.0
    %934 = vmatpush1.xpose.msra.mxu0 0.0
    %935 = vmatprep.mubr.f32.mxu0 0.0
    %936 = vmatmul.mubr.f32.gmra.mrb[0].mxu0 %v863
    %v937 = vpop.f32.mrb[0].mxu0
    %v938 = vadd.f32 0.0, %v937
    %v939 = vpop.f32.mrb[0].mxu0
    %940 = vmatprep.mubr.f32.mxu0 0.0
    %941 = vmatmul.mubr.f32.gmra.mrb[0].mxu0 %v865
    %v942 = vpop.f32.mrb[0].mxu0
    %v943 = vadd.f32 0.0, %v942
    %v944 = vpop.f32.mrb[0].mxu0
    %945 = vdwg.mxu0
    %v946 = vmul.f32 %v938, 0.35355338
    %v947 = vmul.f32 %v943, 0.35355338
    %v948 = vadd.f32 %v946, %v94
    %v949 = vadd.f32 %v947, %v95
    %v950 = vsel %vm335, %v948, -inf
    %951 = vmax.xlane.f32.xlu0 %v950
    %v952 = vpop.xlane.xlu0 %951
    %v953 = vsel %vm335, %v949, -inf
    %954 = vmax.xlane.f32.xlu0 %v953
    %v955 = vpop.xlane.xlu0 %954
    %v956 = vsub.f32 %v948, %v952
    %v957 = vsub.f32 %v949, %v955
    %v958 = vmul.f32 %v956, 1.442695
    %v959 = vpow.pop %v958
    %v960 = vmul.f32 %v957, 1.442695
    %v961 = vpow.pop %v960
    %v962 = vsel %vm335, %v959, 0.0
    %963 = vadd.xlane.f32.xlu0 %v962
    %v964 = vpop.xlane.xlu0 %963
    %v965 = vsel %vm335, %v961, 0.0
    %966 = vadd.xlane.f32.xlu0 %v965
    %v967 = vpop.xlane.xlu0 %966
    %v968 = vrcp.pop %v964
    %v969 = vrcp.pop %v967
    %v970 = vmul.f32 %v959, %v968
    %v971 = vmul.f32 %v961, %v969
    %972 = vrot.lane.b32.xlu0 %v237, 40
    %v973 = vpop.permute.xlu0 %972
    %974 = vrot.lane.b32.xlu0 %v238, 40
    %v975 = vpop.permute.xlu0 %974
    %v979 = vsel %vm335, %v970, 0
    %v982 = vsel %vm335, %v971, 0
    %984 = vmatprep.subr.mxu0 0.0
    %985 = vmatpush1.msra.mxu0 %v973
    %986 = vmatprep.subr.mxu0 0.0
    %987 = vmatpush1.msra.mxu0 %v975
    %988 = vmatprep.subr.mxu0 0.0
    %989 = vmatpush1.msra.mxu0 0.0
    %990 = vmatprep.subr.mxu0 0.0
    %991 = vmatpush1.msra.mxu0 0.0
    %992 = vmatprep.subr.mxu0 0.0
    %993 = vmatpush1.msra.mxu0 0.0
    %994 = vmatprep.subr.mxu0 0.0
    %995 = vmatpush1.msra.mxu0 0.0
    %996 = vmatprep.subr.mxu0 0.0
    %997 = vmatpush1.msra.mxu0 0.0
    %998 = vmatprep.subr.mxu0 0.0
    %999 = vmatpush1.msra.mxu0 0.0
    %1000 = vmatprep.subr.mxu0 0.0
    %1001 = vmatpush1.msra.mxu0 0.0
    %1002 = vmatprep.subr.mxu0 0.0
    %1003 = vmatpush1.msra.mxu0 0.0
    %1004 = vmatprep.subr.mxu0 0.0
    %1005 = vmatpush1.msra.mxu0 0.0
    %1006 = vmatprep.subr.mxu0 0.0
    %1007 = vmatpush1.msra.mxu0 0.0
    %1008 = vmatprep.subr.mxu0 0.0
    %1009 = vmatpush1.msra.mxu0 0.0
    %1010 = vmatprep.subr.mxu0 0.0
    %1011 = vmatpush1.msra.mxu0 0.0
    %1012 = vmatprep.subr.mxu0 0.0
    %1013 = vmatpush1.msra.mxu0 0.0
    %1014 = vmatprep.subr.mxu0 0.0
    %1015 = vmatpush1.msra.mxu0 0.0
    %1016 = vmatprep.subr.mxu0 0.0
    %1017 = vmatpush1.msra.mxu0 0.0
    %1018 = vmatprep.subr.mxu0 0.0
    %1019 = vmatpush1.msra.mxu0 0.0
    %1020 = vmatprep.subr.mxu0 0.0
    %1021 = vmatpush1.msra.mxu0 0.0
    %1022 = vmatprep.subr.mxu0 0.0
    %1023 = vmatpush1.msra.mxu0 0.0
    %1024 = vmatprep.subr.mxu0 0.0
    %1025 = vmatpush1.msra.mxu0 0.0
    %1026 = vmatprep.subr.mxu0 0.0
    %1027 = vmatpush1.msra.mxu0 0.0
    %1028 = vmatprep.subr.mxu0 0.0
    %1029 = vmatpush1.msra.mxu0 0.0
    %1030 = vmatprep.subr.mxu0 0.0
    %1031 = vmatpush1.msra.mxu0 0.0
    %1032 = vmatprep.subr.mxu0 0.0
    %1033 = vmatpush1.msra.mxu0 0.0
    %1034 = vmatprep.subr.mxu0 0.0
    %1035 = vmatpush1.msra.mxu0 0.0
    %1036 = vmatprep.subr.mxu0 0.0
    %1037 = vmatpush1.msra.mxu0 0.0
    %1038 = vmatprep.subr.mxu0 0.0
    %1039 = vmatpush1.msra.mxu0 0.0
    %1040 = vmatprep.subr.mxu0 0.0
    %1041 = vmatpush1.msra.mxu0 0.0
    %1042 = vmatprep.subr.mxu0 0.0
    %1043 = vmatpush1.msra.mxu0 0.0
    %1044 = vmatprep.subr.mxu0 0.0
    %1045 = vmatpush1.msra.mxu0 0.0
    %1046 = vmatprep.subr.mxu0 0.0
    %1047 = vmatpush1.msra.mxu0 0.0
    %1048 = vmatprep.mubr.f32.mxu0 0.0
    %1049 = vmatmul.mubr.f32.gmra.mrb[0].mxu0 %v979
    %v1050 = vpop.f32.mrb[0].mxu0
    %v1051 = vadd.f32 0.0, %v1050
    %v1052 = vpop.f32.mrb[0].mxu0
    %1053 = vmatprep.mubr.f32.mxu0 0.0
    %1054 = vmatmul.mubr.f32.gmra.mrb[0].mxu0 %v982
    %v1055 = vpop.f32.mrb[0].mxu0
    %v1056 = vadd.f32 0.0, %v1055
    %v1057 = vpop.f32.mrb[0].mxu0
    %1058 = vdwg.mxu0
    %1061 = vrot.lane.b32.xlu0 %v643, 8
    %v1062 = vpop.permute.xlu0 %1061
    %1063 = vrot.lane.b32.xlu0 %v648, 8
    %v1064 = vpop.permute.xlu0 %1063
    %1069 = vrot.lane.b32.xlu0 %v847, 16
    %v1070 = vpop.permute.xlu0 %1069
    %1071 = vrot.lane.b32.xlu0 %v852, 16
    %v1072 = vpop.permute.xlu0 %1071
    %1077 = vrot.lane.b32.xlu0 %v1051, 24
    %v1078 = vpop.permute.xlu0 %1077
    %1079 = vrot.lane.b32.xlu0 %v1056, 24
    %v1080 = vpop.permute.xlu0 %1079
    %v1083 = vsel %vm245, %v439, %v1062
    %v1084 = vsel %vm245, %v444, %v1064
    %v1085 = vsel %vm335, %v1083, %v1070
    %v1086 = vsel %vm335, %v1084, %v1072
    %vm1087 = vcmask 195584
    %v1088 = vsel %vm1087, %v1085, %v1078
    %v1089 = vsel %vm1087, %v1086, %v1080
    %v1090 = vlaneseq
    %v1091 = vshrl.u32 %v1090, 7
    %v1092 = vsub.s32 3, %v1091
    %v1093 = vrot.slane %v38, %v1092
    %v1095 = vsel %vm40, %v1088, 0
    %v1098 = vsel %vm40, %v1089, 0
    %v1101 = vsel %vm40, %v26, 0
    %v1104 = vsel %vm40, %v27, 0
    %v1107 = vsel %vm40, %v28, 0
    %v1110 = vsel %vm40, %v29, 0
    %1112 = vmatprep.subr.mxu0 0.0
    %1113 = vmatpush1.xpose.msra.mxu0 %v1101
    %1114 = vmatprep.subr.mxu0 0.0
    %1115 = vmatpush1.xpose.msra.mxu0 %v1104
    %1116 = vmatprep.subr.mxu0 0.0
    %1117 = vmatpush1.xpose.msra.mxu0 %v1107
    %1118 = vmatprep.subr.mxu0 0.0
    %1119 = vmatpush1.xpose.msra.mxu0 %v1110
    %1120 = vmatprep.subr.mxu0 0.0
    %1121 = vmatpush1.xpose.msra.mxu0 0.0
    %1122 = vmatprep.subr.mxu0 0.0
    %1123 = vmatpush1.xpose.msra.mxu0 0.0
    %1124 = vmatprep.subr.mxu0 0.0
    %1125 = vmatpush1.xpose.msra.mxu0 0.0
    %1126 = vmatprep.subr.mxu0 0.0
    %1127 = vmatpush1.xpose.msra.mxu0 0.0
    %1128 = vmatprep.subr.mxu0 0.0
    %1129 = vmatpush1.xpose.msra.mxu0 0.0
    %1130 = vmatprep.subr.mxu0 0.0
    %1131 = vmatpush1.xpose.msra.mxu0 0.0
    %1132 = vmatprep.subr.mxu0 0.0
    %1133 = vmatpush1.xpose.msra.mxu0 0.0
    %1134 = vmatprep.subr.mxu0 0.0
    %1135 = vmatpush1.xpose.msra.mxu0 0.0
    %1136 = vmatprep.subr.mxu0 0.0
    %1137 = vmatpush1.xpose.msra.mxu0 0.0
    %1138 = vmatprep.subr.mxu0 0.0
    %1139 = vmatpush1.xpose.msra.mxu0 0.0
    %1140 = vmatprep.subr.mxu0 0.0
    %1141 = vmatpush1.xpose.msra.mxu0 0.0
    %1142 = vmatprep.subr.mxu0 0.0
    %1143 = vmatpush1.xpose.msra.mxu0 0.0
    %1144 = vmatprep.subr.mxu0 0.0
    %1145 = vmatpush1.xpose.msra.mxu0 0.0
    %1146 = vmatprep.subr.mxu0 0.0
    %1147 = vmatpush1.xpose.msra.mxu0 0.0
    %1148 = vmatprep.subr.mxu0 0.0
    %1149 = vmatpush1.xpose.msra.mxu0 0.0
    %1150 = vmatprep.subr.mxu0 0.0
    %1151 = vmatpush1.xpose.msra.mxu0 0.0
    %1152 = vmatprep.subr.mxu0 0.0
    %1153 = vmatpush1.xpose.msra.mxu0 0.0
    %1154 = vmatprep.subr.mxu0 0.0
    %1155 = vmatpush1.xpose.msra.mxu0 0.0
    %1156 = vmatprep.subr.mxu0 0.0
    %1157 = vmatpush1.xpose.msra.mxu0 0.0
    %1158 = vmatprep.subr.mxu0 0.0
    %1159 = vmatpush1.xpose.msra.mxu0 0.0
    %1160 = vmatprep.subr.mxu0 0.0
    %1161 = vmatpush1.xpose.msra.mxu0 0.0
    %1162 = vmatprep.subr.mxu0 0.0
    %1163 = vmatpush1.xpose.msra.mxu0 0.0
    %1164 = vmatprep.subr.mxu0 0.0
    %1165 = vmatpush1.xpose.msra.mxu0 0.0
    %1166 = vmatprep.subr.mxu0 0.0
    %1167 = vmatpush1.xpose.msra.mxu0 0.0
    %1168 = vmatprep.subr.mxu0 0.0
    %1169 = vmatpush1.xpose.msra.mxu0 0.0
    %1170 = vmatprep.subr.mxu0 0.0
    %1171 = vmatpush1.xpose.msra.mxu0 0.0
    %1172 = vmatprep.subr.mxu0 0.0
    %1173 = vmatpush1.xpose.msra.mxu0 0.0
    %1174 = vmatprep.subr.mxu0 0.0
    %1175 = vmatpush1.xpose.msra.mxu0 0.0
    %1176 = vmatprep.mubr.f32.mxu0 0.0
    %1177 = vmatmul.mubr.f32.gmra.mrb[0].mxu0 %v1095
    %v1178 = vpop.f32.mrb[0].mxu0
    %v1179 = vadd.f32 %v1093, %v1178
    %v1180 = vpop.f32.mrb[0].mxu0
    %1181 = vmatprep.mubr.f32.mxu0 0.0
    %1182 = vmatmul.mubr.f32.gmra.mrb[0].mxu0 %v1098
    %v1183 = vpop.f32.mrb[0].mxu0
    %v1184 = vadd.f32 %v1093, %v1183
    %v1185 = vpop.f32.mrb[0].mxu0
    %1186 = vdwg.mxu0
    %v1187 = vadd.f32 %v1179, %v12
    %v1188 = vadd.f32 %v1184, %v13
    %v1189 = vsel %vm40, %v1187, 0.0
    %1190 = vadd.xlane.f32.xlu0 %v1189
    %v1191 = vpop.xlane.xlu0 %1190
    %v1192 = vsel %vm40, %v1188, 0.0
    %1193 = vadd.xlane.f32.xlu0 %v1192
    %v1194 = vpop.xlane.xlu0 %1193
    %v1195 = vmul.f32 %v1191, %v47
    %v1196 = vmul.f32 %v1194, %v47
    %v1197 = vsub.f32 %v1187, %v1195
    %v1198 = vsub.f32 %v1188, %v1196
    %v1199 = vmul.f32 %v1197, %v1197
    %v1200 = vmul.f32 %v1198, %v1198
    %v1201 = vsel %vm40, %v1199, 0.0
    %1202 = vadd.xlane.f32.xlu0 %v1201
    %v1203 = vpop.xlane.xlu0 %1202
    %v1204 = vsel %vm40, %v1200, 0.0
    %1205 = vadd.xlane.f32.xlu0 %v1204
    %v1206 = vpop.xlane.xlu0 %1205
    %v1207 = vmul.f32 %v1203, %v47
    %v1208 = vmul.f32 %v1206, %v47
    %v1209 = vadd.f32 %v1207, 1e-05
    %v1210 = vadd.f32 %v1208, 1e-05
    %v1211 = vrsqrt.pop %v1209
    %v1212 = vrsqrt.pop %v1210
    %v1213 = vmul.f32 %v1197, %v1211
    %v1214 = vmul.f32 %v1198, %v1212
    %v1215 = vlaneseq
    %v1216 = vshrl.u32 %v1215, 7
    %v1217 = vsub.s32 6, %v1216
    %v1218 = vrot.slane %v38, %v1217
    %v1219 = vmul.f32 %v1213, %v1218
    %v1220 = vmul.f32 %v1214, %v1218
    %v1221 = vlaneseq
    %v1222 = vshrl.u32 %v1221, 7
    %v1223 = vsub.s32 7, %v1222
    %v1224 = vrot.slane %v38, %v1223
    %v1225 = vadd.f32 %v1219, %v1224
    %v1226 = vadd.f32 %v1220, %v1224
    %v1227 = vlaneseq
    %v1228 = vshrl.u32 %v1227, 7
    %v1229 = vsub.s32 0, %v1228
    %v1230 = vrot.slane %v39, %v1229
    %v1232 = vsel %vm40, %v1225, 0
    %v1235 = vsel %vm40, %v1226, 0
    %v1238 = vsel %vm40, %v30, 0
    %v1241 = vsel %vm40, %v31, 0
    %v1244 = vsel %vm40, %v32, 0
    %v1247 = vsel %vm40, %v33, 0
    %1249 = vmatprep.subr.mxu0 0.0
    %1250 = vmatpush1.xpose.msra.mxu0 %v1238
    %1251 = vmatprep.subr.mxu0 0.0
    %1252 = vmatpush1.xpose.msra.mxu0 %v1241
    %1253 = vmatprep.subr.mxu0 0.0
    %1254 = vmatpush1.xpose.msra.mxu0 %v1244
    %1255 = vmatprep.subr.mxu0 0.0
    %1256 = vmatpush1.xpose.msra.mxu0 %v1247
    %1257 = vmatprep.subr.mxu0 0.0
    %1258 = vmatpush1.xpose.msra.mxu0 0.0
    %1259 = vmatprep.subr.mxu0 0.0
    %1260 = vmatpush1.xpose.msra.mxu0 0.0
    %1261 = vmatprep.subr.mxu0 0.0
    %1262 = vmatpush1.xpose.msra.mxu0 0.0
    %1263 = vmatprep.subr.mxu0 0.0
    %1264 = vmatpush1.xpose.msra.mxu0 0.0
    %1265 = vmatprep.subr.mxu0 0.0
    %1266 = vmatpush1.xpose.msra.mxu0 0.0
    %1267 = vmatprep.subr.mxu0 0.0
    %1268 = vmatpush1.xpose.msra.mxu0 0.0
    %1269 = vmatprep.subr.mxu0 0.0
    %1270 = vmatpush1.xpose.msra.mxu0 0.0
    %1271 = vmatprep.subr.mxu0 0.0
    %1272 = vmatpush1.xpose.msra.mxu0 0.0
    %1273 = vmatprep.subr.mxu0 0.0
    %1274 = vmatpush1.xpose.msra.mxu0 0.0
    %1275 = vmatprep.subr.mxu0 0.0
    %1276 = vmatpush1.xpose.msra.mxu0 0.0
    %1277 = vmatprep.subr.mxu0 0.0
    %1278 = vmatpush1.xpose.msra.mxu0 0.0
    %1279 = vmatprep.subr.mxu0 0.0
    %1280 = vmatpush1.xpose.msra.mxu0 0.0
    %1281 = vmatprep.subr.mxu0 0.0
    %1282 = vmatpush1.xpose.msra.mxu0 0.0
    %1283 = vmatprep.subr.mxu0 0.0
    %1284 = vmatpush1.xpose.msra.mxu0 0.0
    %1285 = vmatprep.subr.mxu0 0.0
    %1286 = vmatpush1.xpose.msra.mxu0 0.0
    %1287 = vmatprep.subr.mxu0 0.0
    %1288 = vmatpush1.xpose.msra.mxu0 0.0
    %1289 = vmatprep.subr.mxu0 0.0
    %1290 = vmatpush1.xpose.msra.mxu0 0.0
    %1291 = vmatprep.subr.mxu0 0.0
    %1292 = vmatpush1.xpose.msra.mxu0 0.0
    %1293 = vmatprep.subr.mxu0 0.0
    %1294 = vmatpush1.xpose.msra.mxu0 0.0
    %1295 = vmatprep.subr.mxu0 0.0
    %1296 = vmatpush1.xpose.msra.mxu0 0.0
    %1297 = vmatprep.subr.mxu0 0.0
    %1298 = vmatpush1.xpose.msra.mxu0 0.0
    %1299 = vmatprep.subr.mxu0 0.0
    %1300 = vmatpush1.xpose.msra.mxu0 0.0
    %1301 = vmatprep.subr.mxu0 0.0
    %1302 = vmatpush1.xpose.msra.mxu0 0.0
    %1303 = vmatprep.subr.mxu0 0.0
    %1304 = vmatpush1.xpose.msra.mxu0 0.0
    %1305 = vmatprep.subr.mxu0 0.0
    %1306 = vmatpush1.xpose.msra.mxu0 0.0
    %1307 = vmatprep.subr.mxu0 0.0
    %1308 = vmatpush1.xpose.msra.mxu0 0.0
    %1309 = vmatprep.subr.mxu0 0.0
    %1310 = vmatpush1.xpose.msra.mxu0 0.0
    %1311 = vmatprep.subr.mxu0 0.0
    %1312 = vmatpush1.xpose.msra.mxu0 0.0
    %1313 = vmatprep.mubr.f32.mxu0 0.0
    %1314 = vmatmul.mubr.f32.gmra.mrb[0].mxu0 %v1232
    %v1315 = vpop.f32.mrb[0].mxu0
    %v1316 = vadd.f32 %v1230, %v1315
    %v1317 = vpop.f32.mrb[0].mxu0
    %1318 = vmatprep.mubr.f32.mxu0 0.0
    %1319 = vmatmul.mubr.f32.gmra.mrb[0].mxu0 %v1235
    %v1320 = vpop.f32.mrb[0].mxu0
    %v1321 = vadd.f32 %v1230, %v1320
    %v1322 = vpop.f32.mrb[0].mxu0
    %1323 = vdwg.mxu0
    %v1324 = vmax.f32 %v1316, 0.0
    %v1325 = vmax.f32 %v1321, 0.0
    %v1326 = vlaneseq
    %v1327 = vshrl.u32 %v1326, 7
    %v1328 = vsub.s32 1, %v1327
    %v1329 = vrot.slane %v39, %v1328
    %v1331 = vsel %vm40, %v1324, 0
    %v1334 = vsel %vm40, %v1325, 0
    %v1337 = vsel %vm40, %v34, 0
    %v1340 = vsel %vm40, %v35, 0
    %v1343 = vsel %vm40, %v36, 0
    %v1346 = vsel %vm40, %v37, 0
    %1348 = vmatprep.subr.mxu0 0.0
    %1349 = vmatpush1.xpose.msra.mxu0 %v1337
    %1350 = vmatprep.subr.mxu0 0.0
    %1351 = vmatpush1.xpose.msra.mxu0 %v1340
    %1352 = vmatprep.subr.mxu0 0.0
    %1353 = vmatpush1.xpose.msra.mxu0 %v1343
    %1354 = vmatprep.subr.mxu0 0.0
    %1355 = vmatpush1.xpose.msra.mxu0 %v1346
    %1356 = vmatprep.subr.mxu0 0.0
    %1357 = vmatpush1.xpose.msra.mxu0 0.0
    %1358 = vmatprep.subr.mxu0 0.0
    %1359 = vmatpush1.xpose.msra.mxu0 0.0
    %1360 = vmatprep.subr.mxu0 0.0
    %1361 = vmatpush1.xpose.msra.mxu0 0.0
    %1362 = vmatprep.subr.mxu0 0.0
    %1363 = vmatpush1.xpose.msra.mxu0 0.0
    %1364 = vmatprep.subr.mxu0 0.0
    %1365 = vmatpush1.xpose.msra.mxu0 0.0
    %1366 = vmatprep.subr.mxu0 0.0
    %1367 = vmatpush1.xpose.msra.mxu0 0.0
    %1368 = vmatprep.subr.mxu0 0.0
    %1369 = vmatpush1.xpose.msra.mxu0 0.0
    %1370 = vmatprep.subr.mxu0 0.0
    %1371 = vmatpush1.xpose.msra.mxu0 0.0
    %1372 = vmatprep.subr.mxu0 0.0
    %1373 = vmatpush1.xpose.msra.mxu0 0.0
    %1374 = vmatprep.subr.mxu0 0.0
    %1375 = vmatpush1.xpose.msra.mxu0 0.0
    %1376 = vmatprep.subr.mxu0 0.0
    %1377 = vmatpush1.xpose.msra.mxu0 0.0
    %1378 = vmatprep.subr.mxu0 0.0
    %1379 = vmatpush1.xpose.msra.mxu0 0.0
    %1380 = vmatprep.subr.mxu0 0.0
    %1381 = vmatpush1.xpose.msra.mxu0 0.0
    %1382 = vmatprep.subr.mxu0 0.0
    %1383 = vmatpush1.xpose.msra.mxu0 0.0
    %1384 = vmatprep.subr.mxu0 0.0
    %1385 = vmatpush1.xpose.msra.mxu0 0.0
    %1386 = vmatprep.subr.mxu0 0.0
    %1387 = vmatpush1.xpose.msra.mxu0 0.0
    %1388 = vmatprep.subr.mxu0 0.0
    %1389 = vmatpush1.xpose.msra.mxu0 0.0
    %1390 = vmatprep.subr.mxu0 0.0
    %1391 = vmatpush1.xpose.msra.mxu0 0.0
    %1392 = vmatprep.subr.mxu0 0.0
    %1393 = vmatpush1.xpose.msra.mxu0 0.0
    %1394 = vmatprep.subr.mxu0 0.0
    %1395 = vmatpush1.xpose.msra.mxu0 0.0
    %1396 = vmatprep.subr.mxu0 0.0
    %1397 = vmatpush1.xpose.msra.mxu0 0.0
    %1398 = vmatprep.subr.mxu0 0.0
    %1399 = vmatpush1.xpose.msra.mxu0 0.0
    %1400 = vmatprep.subr.mxu0 0.0
    %1401 = vmatpush1.xpose.msra.mxu0 0.0
    %1402 = vmatprep.subr.mxu0 0.0
    %1403 = vmatpush1.xpose.msra.mxu0 0.0
    %1404 = vmatprep.subr.mxu0 0.0
    %1405 = vmatpush1.xpose.msra.mxu0 0.0
    %1406 = vmatprep.subr.mxu0 0.0
    %1407 = vmatpush1.xpose.msra.mxu0 0.0
    %1408 = vmatprep.subr.mxu0 0.0
    %1409 = vmatpush1.xpose.msra.mxu0 0.0
    %1410 = vmatprep.subr.mxu0 0.0
    %1411 = vmatpush1.xpose.msra.mxu0 0.0
    %1412 = vmatprep.mubr.f32.mxu0 0.0
    %1413 = vmatmul.mubr.f32.gmra.mrb[0].mxu0 %v1331
    %v1414 = vpop.f32.mrb[0].mxu0
    %v1415 = vadd.f32 %v1329, %v1414
    %v1416 = vpop.f32.mrb[0].mxu0
    %1417 = vmatprep.mubr.f32.mxu0 0.0
    %1418 = vmatmul.mubr.f32.gmra.mrb[0].mxu0 %v1334
    %v1419 = vpop.f32.mrb[0].mxu0
    %v1420 = vadd.f32 %v1329, %v1419
    %v1421 = vpop.f32.mrb[0].mxu0
    %1422 = vdwg.mxu0
    %v1423 = vadd.f32 %v1415, %v1225
    %v1424 = vadd.f32 %v1420, %v1226
    %v1425 = vadd.f32 %v1423, %v78
    %v1426 = vadd.f32 %v1424, %v79
    %1427 = vst.msk [vmem:[#allocation2] sm:$0xff] %vm40, %v1425
    %1428 = vst.msk [vmem:[#allocation2 + $0x8] sm:$0xff] %vm40, %v1426
    // Predicated region
    $region10: #{tpu_custom_call.1} parent=1 // pred_check
      _
    $region11: #{tpu_custom_call.1} parent=1 // pred_check_branch
      %1430 = sbr.rel (0) target = $region13
    $region12: #{tpu_custom_call.1} parent=1 // pred_region
      %s1432 = ssub.s32 256, 256
      %1433 = vsyncadd [#allocation3], %s1432
      %s1434 = sshll.u32 [#allocation2], 4
      %s1435 = int_to_ptr.vmem [resolvable:$true] %s1434
      %1440 = dma.vmem_to_hbm [thread:$0]  %s1435, 256, %s2, [#allocation3], 128, 128, 8
    $region13: #{tpu_custom_call.1} parent=1 // pred_fallthru
      _
    // Predicated region
    $region14: #{tpu_custom_call.1} parent=1 // pred_check
      _
    $region15: #{tpu_custom_call.1} parent=1 // pred_check_branch
      %1442 = sbr.rel (0) target = $region17
    $region16: #{tpu_custom_call.1} parent=1 // pred_region
      %1443 = dma.done [#allocation3], 256
    $region17: #{tpu_custom_call.1} parent=1 // pred_fallthru
      _
    %1444 = vsyncpa [#allocation3], 1

</llo_original>
